<compile_context>
chip_gen: v7x
topology: tpu7x:2x2x1
jax: 0.10.0
libtpu: 0.0.40
codegen_flags: <defaults>
</compile_context>

<pallas_src>
import jax
import jax.numpy as jnp
from jax.experimental import pallas as pl
from jax.experimental.pallas import tpu as pltpu

IN_DIM = 28 * 28        # 784 (= 98 * 8, clean sublane layout already)
H1 = 512
H2 = 256
OUT = 1
MAX_TB = 1024           # max batch tile (VMEM-safe on v5e/v6e/v7x)


def _round_up(x, m):
    return ((x + m - 1) // m) * m


def _disc_kernel(x_ref, w1_ref, b1_ref, w2_ref, b2_ref, w3_ref, b3_ref, o_ref):
    # x_ref: (tb, 784) bf16 tile of the flattened image batch.
    x = x_ref[...]

    # fc1 + ReLU : bf16 MXU matmul with f32 accumulation, f32 elementwise.
    h1 = jnp.dot(x, w1_ref[...], preferred_element_type=jnp.float32)
    h1 = jnp.maximum(h1 + b1_ref[...], 0.0)                      # (tb, 512) f32

    # fc2 + ReLU : cast activations back to bf16 for the MXU (cheap VPU cast).
    h2 = jnp.dot(h1.astype(jnp.bfloat16), w2_ref[...],
                 preferred_element_type=jnp.float32)
    h2 = jnp.maximum(h2 + b2_ref[...], 0.0)                      # (tb, 256) f32

    # fc3 (256 -> 1) on the VPU/XLU: broadcast-multiply by the (1, 256) weight
    # row and reduce over lanes (avoids a near-empty Nx256x1 MXU matmul).
    logits = jnp.sum(h2 * w3_ref[...].astype(jnp.float32),
                     axis=-1, keepdims=True)                     # (tb, 1) f32
    logits = logits + b3_ref[0, 0]                               # scalar bias (SMEM)

    o_ref[...] = jax.nn.sigmoid(logits).astype(o_ref.dtype)


def discriminator_forward(img, params, *, max_tb=MAX_TB):
    """img: (B, 1, 28, 28) float32 (NCHW). Returns (B, 1) float32."""
    w1, b1, w2, b2, w3, b3 = params
    B = img.shape[0]

    x = img.reshape(B, -1)                                       # (B, 784)

    # Batch-tile selection:
    #  * small batches (<= 256): one tile, rounded to 16 rows (bf16 sublane tile)
    #  * larger batches: >= 2 tiles (v7x has 2 TensorCores), each a multiple of
    #    256 rows, capped at max_tb.  GAN batches are usually powers of two, so
    #    this normally divides B exactly and no wrapper-side pad materializes.
    if B <= 256:
        tb = _round_up(max(B, 1), 16)
    else:
        tb = min(max_tb, _round_up(pl.cdiv(B, 2), 256))
    b_pad = _round_up(B, tb)
    num_tiles = b_pad // tb

    # bf16 for everything that feeds the MXU; biases stay f32.
    x = x.astype(jnp.bfloat16)
    if b_pad != B:
        x = jnp.pad(x, ((0, b_pad - B), (0, 0)))
    w1b = w1.astype(jnp.bfloat16)                                # (784, 512)
    w2b = w2.astype(jnp.bfloat16)                                # (512, 256)
    w3_row = w3.reshape(1, H2).astype(jnp.bfloat16)              # (1, 256)
    b1f = b1.astype(jnp.float32)                                 # (1, 512)
    b2f = b2.astype(jnp.float32)                                 # (1, 256)
    b3s = b3.reshape(1, 1).astype(jnp.float32)                   # scalar -> SMEM

    cost = pl.CostEstimate(
        flops=2 * b_pad * (IN_DIM * H1 + H1 * H2 + H2),
        transcendentals=b_pad,                                   # sigmoid
        bytes_accessed=(b_pad * IN_DIM * 2                       # x (bf16)
                        + (IN_DIM * H1 + H1 * H2 + H2) * 2       # weights (bf16)
                        + (H1 + H2 + 1) * 4                      # biases (f32)
                        + b_pad * OUT * 4),                      # output (f32)
    )

    out = pl.pallas_call(
        _disc_kernel,
        out_shape=jax.ShapeDtypeStruct((b_pad, OUT), jnp.float32),
        grid=(num_tiles,),
        in_specs=[
            pl.BlockSpec((tb, IN_DIM), lambda i: (i, 0)),        # x: batch-tiled
            pl.BlockSpec((IN_DIM, H1), lambda i: (0, 0)),        # w1: VMEM-resident
            pl.BlockSpec((1, H1), lambda i: (0, 0)),             # b1
            pl.BlockSpec((H1, H2), lambda i: (0, 0)),            # w2
            pl.BlockSpec((1, H2), lambda i: (0, 0)),             # b2
            pl.BlockSpec((1, H2), lambda i: (0, 0)),             # w3 row
            pl.BlockSpec(memory_space=pltpu.MemorySpace.SMEM),   # b3 scalar
        ],
        out_specs=pl.BlockSpec((tb, OUT), lambda i: (i, 0)),
        compiler_params=pltpu.CompilerParams(
            dimension_semantics=("parallel",),
            vmem_limit_bytes=32 << 20,
        ),
        cost_estimate=cost,
    )(x, w1b, b1f, w2b, b2f, w3_row, b3s)

    return out[:B]


def init_params(key):
    """Deterministic init mimicking nn.Linear (uniform(-1/sqrt(fan_in), 1/sqrt(fan_in)))."""
    def linear(k, fan_in, fan_out):
        kw, kb = jax.random.split(k)
        bound = 1.0 / jnp.sqrt(fan_in)
        # Stored as (in, out) so the kernel can do x @ W directly.
        w = jax.random.uniform(kw, (fan_in, fan_out), jnp.float32, -bound, bound)
        b = jax.random.uniform(kb, (1, fan_out), jnp.float32, -bound, bound)
        return w, b

    k1, k2, k3 = jax.random.split(key, 3)
    w1, b1 = linear(k1, IN_DIM, H1)
    w2, b2 = linear(k2, H1, H2)
    w3, b3 = linear(k3, H2, OUT)
    return (w1, b1, w2, b2, w3, b3)


def reference_forward(img, params):
    """Pure f32 JAX reference matching the PyTorch module."""
    w1, b1, w2, b2, w3, b3 = params
    x = img.reshape(img.shape[0], -1)
    h1 = jnp.maximum(x @ w1 + b1, 0.0)
    h2 = jnp.maximum(h1 @ w2 + b2, 0.0)
    return jax.nn.sigmoid(h2 @ w3 + b3)


if __name__ == "__main__":
    key = jax.random.PRNGKey(0)
    k_img, k_params = jax.random.split(key)

    B = 2
    img = jax.random.normal(k_img, (B, 1, 28, 28), jnp.float32)   # NCHW, like MNIST
    params = init_params(k_params)

    out = discriminator_forward(img, params)
    out = jax.block_until_ready(out)

    ref = reference_forward(img, params)
    assert out.shape == (B, 1), out.shape
    # bf16 MXU matmuls (f32 accumulation) => loosened tolerance vs f32 reference.
    assert jnp.allclose(out, ref, atol=1e-2, rtol=1e-2), (out, ref)

    print("KERNEL_OK")
</pallas_src>

<mosaic_0001>
module attributes {stable_mosaic.version = 11 : i64} {
  func.func @_disc_kernel(%arg0: i32, %arg1: memref<16x784xbf16, #tpu.memory_space<vmem>>, %arg2: memref<784x512xbf16, #tpu.memory_space<vmem>>, %arg3: memref<1x512xf32, #tpu.memory_space<vmem>>, %arg4: memref<512x256xbf16, #tpu.memory_space<vmem>>, %arg5: memref<1x256xf32, #tpu.memory_space<vmem>>, %arg6: memref<1x256xbf16, #tpu.memory_space<vmem>>, %arg7: memref<1x1xf32, #tpu.memory_space<smem>>, %arg8: memref<16x1xf32, #tpu.memory_space<vmem>>) attributes {dimension_semantics = [#tpu.dimension_semantics<parallel>], iteration_bounds = array<i64: 1>, scalar_prefetch = 0 : i64, scratch_operands = 0 : i64, tpu.core_type = #tpu.core_type<tc>, window_params = [{transform_indices = @transform_0, window_bounds = array<i64: 16, 784>}, {pipeline_mode = #tpu.pipeline_mode<synchronous>, transform_indices = @transform_1, window_bounds = array<i64: 784, 512>}, {pipeline_mode = #tpu.pipeline_mode<synchronous>, transform_indices = @transform_2, window_bounds = array<i64: 1, 512>}, {pipeline_mode = #tpu.pipeline_mode<synchronous>, transform_indices = @transform_3, window_bounds = array<i64: 512, 256>}, {pipeline_mode = #tpu.pipeline_mode<synchronous>, transform_indices = @transform_4, window_bounds = array<i64: 1, 256>}, {pipeline_mode = #tpu.pipeline_mode<synchronous>, transform_indices = @transform_5, window_bounds = array<i64: 1, 256>}, {transform_indices = @transform_6, window_bounds = array<i64: 1, 1>}, {transform_indices = @transform_7, window_bounds = array<i64: 16, 1>}]} {
    %c0 = arith.constant 0 : index
    %c0_0 = arith.constant 0 : index
    %0 = vector.load %arg1[%c0, %c0_0] : memref<16x784xbf16, #tpu.memory_space<vmem>>, vector<16x784xbf16>
    %c0_1 = arith.constant 0 : index
    %c0_2 = arith.constant 0 : index
    %1 = vector.load %arg2[%c0_1, %c0_2] : memref<784x512xbf16, #tpu.memory_space<vmem>>, vector<784x512xbf16>
    %cst = arith.constant dense<0.000000e+00> : vector<16x512xf32>
    %2 = tpu.matmul %0, %1, %cst {dimension_numbers = #tpu.dot_dimension_numbers<[1], [0], [0], [1], [0, 0, 1, 1], [], []>} : vector<16x784xbf16>, vector<784x512xbf16>, vector<16x512xf32> -> vector<16x512xf32>
    %c0_3 = arith.constant 0 : index
    %c0_4 = arith.constant 0 : index
    %3 = vector.load %arg3[%c0_3, %c0_4] : memref<1x512xf32, #tpu.memory_space<vmem>>, vector<1x512xf32>
    %4 = vector.broadcast %3 : vector<1x512xf32> to vector<16x512xf32>
    %5 = arith.addf %2, %4 : vector<16x512xf32>
    %cst_5 = arith.constant 0.000000e+00 : f32
    %6 = vector.broadcast %cst_5 : f32 to vector<16x512xf32>
    %7 = arith.maximumf %5, %6 : vector<16x512xf32>
    %8 = arith.truncf %7 : vector<16x512xf32> to vector<16x512xbf16>
    %c0_6 = arith.constant 0 : index
    %c0_7 = arith.constant 0 : index
    %9 = vector.load %arg4[%c0_6, %c0_7] : memref<512x256xbf16, #tpu.memory_space<vmem>>, vector<512x256xbf16>
    %cst_8 = arith.constant dense<0.000000e+00> : vector<16x256xf32>
    %10 = tpu.matmul %8, %9, %cst_8 {dimension_numbers = #tpu.dot_dimension_numbers<[1], [0], [0], [1], [0, 0, 1, 1], [], []>} : vector<16x512xbf16>, vector<512x256xbf16>, vector<16x256xf32> -> vector<16x256xf32>
    %c0_9 = arith.constant 0 : index
    %c0_10 = arith.constant 0 : index
    %11 = vector.load %arg5[%c0_9, %c0_10] : memref<1x256xf32, #tpu.memory_space<vmem>>, vector<1x256xf32>
    %12 = vector.broadcast %11 : vector<1x256xf32> to vector<16x256xf32>
    %13 = arith.addf %10, %12 : vector<16x256xf32>
    %cst_11 = arith.constant 0.000000e+00 : f32
    %14 = vector.broadcast %cst_11 : f32 to vector<16x256xf32>
    %15 = arith.maximumf %13, %14 : vector<16x256xf32>
    %c0_12 = arith.constant 0 : index
    %c0_13 = arith.constant 0 : index
    %16 = vector.load %arg6[%c0_12, %c0_13] : memref<1x256xbf16, #tpu.memory_space<vmem>>, vector<1x256xbf16>
    %17 = arith.extf %16 : vector<1x256xbf16> to vector<1x256xf32>
    %18 = vector.broadcast %17 : vector<1x256xf32> to vector<16x256xf32>
    %19 = arith.mulf %15, %18 : vector<16x256xf32>
    %cst_14 = arith.constant dense<0.000000e+00> : vector<16xf32>
    %20 = vector.multi_reduction <add>, %19, %cst_14 [1] : vector<16x256xf32> to vector<16xf32>
    %21 = vector.shape_cast %20 : vector<16xf32> to vector<16x1xf32>
    %c0_15 = arith.constant 0 : index
    %c0_16 = arith.constant 0 : index
    %22 = memref.load %arg7[%c0_15, %c0_16] : memref<1x1xf32, #tpu.memory_space<smem>>
    %23 = vector.broadcast %22 : f32 to vector<16x1xf32>
    %24 = arith.addf %21, %23 : vector<16x1xf32>
    %25 = arith.negf %24 : vector<16x1xf32>
    %26 = math.exp %25 : vector<16x1xf32>
    %cst_17 = arith.constant 1.000000e+00 : f32
    %27 = vector.broadcast %cst_17 : f32 to vector<16x1xf32>
    %28 = arith.addf %27, %26 : vector<16x1xf32>
    %29 = arith.divf %27, %28 : vector<16x1xf32>
    %c0_18 = arith.constant 0 : index
    %c0_19 = arith.constant 0 : index
    %30 = vector.load %arg8[%c0_18, %c0_19] : memref<16x1xf32, #tpu.memory_space<vmem>>, vector<16x1xf32>
    tpu.vector_store %arg8[%c0_18, %c0_19], %29 {strides = array<i32>} : memref<16x1xf32, #tpu.memory_space<vmem>>, vector<16x1xf32>,
    return
  }
  func.func @transform_0(%arg0: i32) -> (i32, i32) {
    %c0_i32 = arith.constant 0 : i32
    %c0_i32_0 = arith.constant 0 : i32
    return %arg0, %c0_i32 : i32, i32
  }
  func.func @transform_1(%arg0: i32) -> (i32, i32) {
    %c0_i32 = arith.constant 0 : i32
    %c0_i32_0 = arith.constant 0 : i32
    %c0_i32_1 = arith.constant 0 : i32
    return %c0_i32, %c0_i32_0 : i32, i32
  }
  func.func @transform_2(%arg0: i32) -> (i32, i32) {
    %c0_i32 = arith.constant 0 : i32
    %c0_i32_0 = arith.constant 0 : i32
    %c0_i32_1 = arith.constant 0 : i32
    return %c0_i32, %c0_i32_0 : i32, i32
  }
  func.func @transform_3(%arg0: i32) -> (i32, i32) {
    %c0_i32 = arith.constant 0 : i32
    %c0_i32_0 = arith.constant 0 : i32
    %c0_i32_1 = arith.constant 0 : i32
    return %c0_i32, %c0_i32_0 : i32, i32
  }
  func.func @transform_4(%arg0: i32) -> (i32, i32) {
    %c0_i32 = arith.constant 0 : i32
    %c0_i32_0 = arith.constant 0 : i32
    %c0_i32_1 = arith.constant 0 : i32
    return %c0_i32, %c0_i32_0 : i32, i32
  }
  func.func @transform_5(%arg0: i32) -> (i32, i32) {
    %c0_i32 = arith.constant 0 : i32
    %c0_i32_0 = arith.constant 0 : i32
    %c0_i32_1 = arith.constant 0 : i32
    return %c0_i32, %c0_i32_0 : i32, i32
  }
  func.func @transform_6(%arg0: i32) -> (i32, i32) {
    %c0_i32 = arith.constant 0 : i32
    %c0_i32_0 = arith.constant 0 : i32
    %c0_i32_1 = arith.constant 0 : i32
    return %c0_i32, %c0_i32_0 : i32, i32
  }
  func.func @transform_7(%arg0: i32) -> (i32, i32) {
    %c0_i32 = arith.constant 0 : i32
    %c0_i32_0 = arith.constant 0 : i32
    return %arg0, %c0_i32 : i32, i32
  }
}

</mosaic_0001>

<llo_original>
// kernel: tpu_custom_call.1
$region0: #{tpu_custom_call.1}
  #allocation0 [shape = 'u32[]', space=smem, size = 0x4, offset = 0x4, fixed_abs, tag = 'smem constant byte address 0x4 - core index']
  #allocation1 [shape = 'u32[144,128]{1,0:T(1,128)}', space=vmem, size = 0x12000, scoped, tag = 'internal scratch']
  #allocation2 [shape = 'f32[1,1]{1,0:T(1,128)S(6)}', space=smem, size = 0x200, scoped, tag = 'scoped memory for tpu_custom_call.1']
  %s0 = inlined_call_operand.hbm [shape: bf16[16,784], index: 0, kind: input, shape index: {}]
  %s1 = inlined_call_operand.hbm [shape: bf16[784,512], index: 1, kind: input, shape index: {}]
  %s2 = inlined_call_operand.vmem [shape: f32[1,512], index: 2, kind: input, shape index: {}]
  %s3 = inlined_call_operand.hbm [shape: bf16[512,256], index: 3, kind: input, shape index: {}]
  %s4 = inlined_call_operand.vmem [shape: f32[1,256], index: 4, kind: input, shape index: {}]
  %s5 = inlined_call_operand.vmem [shape: bf16[1,256], index: 5, kind: input, shape index: {}]
  %s6 = inlined_call_operand.<no memory space> [shape: f32[1,1], index: 6, kind: input, shape index: {}]
  %s7 = inlined_call_operand.vmem [shape: f32[16,1], index: 7, kind: output, shape index: {}]
  %s8 = sld [smem:[#allocation0]]
  $region50: #{tpu_custom_call.1} parent=0
    _
  %s10 = ssub.s32 1, %s8
  %s11 = scalar_select 0, %s10, %s8
  %12 = sst [smem:[#allocation2]] %s6
  $region1: #{tpu_custom_call.1} parent=0
    #allocation3 [shape = 'u8[28672]{0}', space=vmem, size = 0x7000, scoped, tag = 'input window, operand 0, single buffered']
    #allocation4 [shape = 's32[1]{0}', space=sflag, size = 0x4, scoped, tag = 'scoped memory for tpu_custom_call.1']
    #allocation5 [shape = 'u8[802816]{0}', space=vmem, size = 0xc4000, scoped, tag = 'input window, operand 1, single buffered']
    #allocation6 [shape = 's32[1]{0}', space=sflag, size = 0x4, scoped, tag = 'scoped memory for tpu_custom_call.1']
    #allocation7 [shape = 'u8[262144]{0}', space=vmem, size = 0x40000, scoped, tag = 'input window, operand 3, single buffered']
    %13 = vsyncpa [#allocation4], 0
    %14 = vsyncpa [#allocation6], 0
    // Predicated region
    $region2: #{tpu_custom_call.1} parent=1 // pred_check
      _
    $region3: #{tpu_custom_call.1} parent=1 // pred_check_branch
      %16 = sbr.rel (0) target = $region5
    $region4: #{tpu_custom_call.1} parent=1 // pred_region
      %s18 = ssub.s32 896, 896
      %19 = vsyncadd [#allocation4], %s18
      %s20 = sshll.u32 [#allocation3], 4
      %s21 = int_to_ptr.vmem [resolvable:$true] %s20
      %26 = dma.hbm_to_vmem [thread:$0]  %s0, 896, %s21, [#allocation4], 448, 448, 28
    $region5: #{tpu_custom_call.1} parent=1 // pred_fallthru
      _
    // Predicated region
    $region6: #{tpu_custom_call.1} parent=1 // pred_check
      _
    $region7: #{tpu_custom_call.1} parent=1 // pred_check_branch
      %28 = sbr.rel (0) target = $region9
    $region8: #{tpu_custom_call.1} parent=1 // pred_region
      %s30 = ssub.s32 25088, 25088
      %31 = vsyncadd [#allocation6], %s30
      %s32 = sshll.u32 [#allocation5], 4
      %s33 = int_to_ptr.vmem [resolvable:$true] %s32
      %38 = dma.hbm_to_vmem [thread:$0]  %s1, 25088, %s33, [#allocation6], 256, 256, 16
    $region9: #{tpu_custom_call.1} parent=1 // pred_fallthru
      _
    // Predicated region
    $region10: #{tpu_custom_call.1} parent=1 // pred_check
      _
    $region11: #{tpu_custom_call.1} parent=1 // pred_check_branch
      %40 = sbr.rel (0) target = $region13
    $region12: #{tpu_custom_call.1} parent=1 // pred_region
      _
    $region13: #{tpu_custom_call.1} parent=1 // pred_fallthru
      _
    // Predicated region
    $region14: #{tpu_custom_call.1} parent=1 // pred_check
      _
    $region15: #{tpu_custom_call.1} parent=1 // pred_check_branch
      %42 = sbr.rel (0) target = $region17
    $region16: #{tpu_custom_call.1} parent=1 // pred_region
      %s44 = ssub.s32 8192, 8192
      %45 = vsyncadd [#allocation6], %s44
      %s46 = sshll.u32 [#allocation7], 4
      %s47 = int_to_ptr.vmem [resolvable:$true] %s46
      %52 = dma.hbm_to_vmem [thread:$0]  %s3, 8192, %s47, [#allocation6], 128, 128, 8
    $region17: #{tpu_custom_call.1} parent=1 // pred_fallthru
      _
    // Predicated region
    $region18: #{tpu_custom_call.1} parent=1 // pred_check
      _
    $region19: #{tpu_custom_call.1} parent=1 // pred_check_branch
      %54 = sbr.rel (0) target = $region21
    $region20: #{tpu_custom_call.1} parent=1 // pred_region
      _
    $region21: #{tpu_custom_call.1} parent=1 // pred_fallthru
      _
    // Predicated region
    $region22: #{tpu_custom_call.1} parent=1 // pred_check
      _
    $region23: #{tpu_custom_call.1} parent=1 // pred_check_branch
      %56 = sbr.rel (0) target = $region25
    $region24: #{tpu_custom_call.1} parent=1 // pred_region
      _
    $region25: #{tpu_custom_call.1} parent=1 // pred_fallthru
      _
    // Predicated region
    $region26: #{tpu_custom_call.1} parent=1 // pred_check
      _
    $region27: #{tpu_custom_call.1} parent=1 // pred_check_branch
      %58 = sbr.rel (0) target = $region29
    $region28: #{tpu_custom_call.1} parent=1 // pred_region
      _
    $region29: #{tpu_custom_call.1} parent=1 // pred_fallthru
      _
    // Predicated region
    $region30: #{tpu_custom_call.1} parent=1 // pred_check
      _
    $region31: #{tpu_custom_call.1} parent=1 // pred_check_branch
      %60 = sbr.rel (0) target = $region33
    $region32: #{tpu_custom_call.1} parent=1 // pred_region
      %61 = dma.done [#allocation4], 896
    $region33: #{tpu_custom_call.1} parent=1 // pred_fallthru
      _
    // Predicated region
    $region34: #{tpu_custom_call.1} parent=1 // pred_check
      _
    $region35: #{tpu_custom_call.1} parent=1 // pred_check_branch
      %63 = sbr.rel (0) target = $region37
    $region36: #{tpu_custom_call.1} parent=1 // pred_region
      %64 = dma.done [#allocation6], 25088
    $region37: #{tpu_custom_call.1} parent=1 // pred_fallthru
      _
    // Predicated region
    $region38: #{tpu_custom_call.1} parent=1 // pred_check
      _
    $region39: #{tpu_custom_call.1} parent=1 // pred_check_branch
      %66 = sbr.rel (0) target = $region41
    $region40: #{tpu_custom_call.1} parent=1 // pred_region
      %67 = dma.done [#allocation6], 8192
    $region41: #{tpu_custom_call.1} parent=1 // pred_fallthru
      _
    %v69 = vld [vmem:[#allocation3] sm:$0xff]
    %v70 = vld [vmem:[#allocation3 + $0x8] sm:$0xff]
    %v71 = vld [vmem:[#allocation3 + $0x10] sm:$0xff]
    %v72 = vld [vmem:[#allocation3 + $0x18] sm:$0xf]
    %v73 = vld [vmem:[#allocation3 + $0x1c] sm:$0xff]
    %v74 = vld [vmem:[#allocation3 + $0x24] sm:$0xff]
    %v75 = vld [vmem:[#allocation3 + $0x2c] sm:$0xff]
    %v76 = vld [vmem:[#allocation3 + $0x34] sm:$0xf]
    %v77 = vld [vmem:[#allocation5] sm:$0xff]
    %v78 = vld [vmem:[#allocation5 + $0x8] sm:$0xff]
    %v79 = vld [vmem:[#allocation5 + $0x10] sm:$0xff]
    %v80 = vld [vmem:[#allocation5 + $0x18] sm:$0xff]
    %v81 = vld [vmem:[#allocation5 + $0x20] sm:$0xff]
    %v82 = vld [vmem:[#allocation5 + $0x28] sm:$0xff]
    %v83 = vld [vmem:[#allocation5 + $0x30] sm:$0xff]
    %v84 = vld [vmem:[#allocation5 + $0x38] sm:$0xff]
    %v85 = vld [vmem:[#allocation5 + $0x40] sm:$0xff]
    %v86 = vld [vmem:[#allocation5 + $0x48] sm:$0xff]
    %v87 = vld [vmem:[#allocation5 + $0x50] sm:$0xff]
    %v88 = vld [vmem:[#allocation5 + $0x58] sm:$0xff]
    %v89 = vld [vmem:[#allocation5 + $0x60] sm:$0xff]
    %v90 = vld [vmem:[#allocation5 + $0x68] sm:$0xff]
    %v91 = vld [vmem:[#allocation5 + $0x70] sm:$0xff]
    %v92 = vld [vmem:[#allocation5 + $0x78] sm:$0xff]
    %v93 = vld [vmem:[#allocation5 + $0x80] sm:$0xff]
    %v94 = vld [vmem:[#allocation5 + $0x88] sm:$0xff]
    %v95 = vld [vmem:[#allocation5 + $0x90] sm:$0xff]
    %v96 = vld [vmem:[#allocation5 + $0x98] sm:$0xff]
    %v97 = vld [vmem:[#allocation5 + $0xa0] sm:$0xff]
    %v98 = vld [vmem:[#allocation5 + $0xa8] sm:$0xff]
    %v99 = vld [vmem:[#allocation5 + $0xb0] sm:$0xff]
    %v100 = vld [vmem:[#allocation5 + $0xb8] sm:$0xff]
    %v101 = vld [vmem:[#allocation5 + $0xc0] sm:$0xff]
    %v102 = vld [vmem:[#allocation5 + $0xc8] sm:$0xff]
    %v103 = vld [vmem:[#allocation5 + $0xd0] sm:$0xff]
    %v104 = vld [vmem:[#allocation5 + $0xd8] sm:$0xff]
    %v105 = vld [vmem:[#allocation5 + $0xe0] sm:$0xff]
    %v106 = vld [vmem:[#allocation5 + $0xe8] sm:$0xff]
    %v107 = vld [vmem:[#allocation5 + $0xf0] sm:$0xff]
    %v108 = vld [vmem:[#allocation5 + $0xf8] sm:$0xff]
    %v109 = vld [vmem:[#allocation5 + $0x100] sm:$0xff]
    %v110 = vld [vmem:[#allocation5 + $0x108] sm:$0xff]
    %v111 = vld [vmem:[#allocation5 + $0x110] sm:$0xff]
    %v112 = vld [vmem:[#allocation5 + $0x118] sm:$0xff]
    %v113 = vld [vmem:[#allocation5 + $0x120] sm:$0xff]
    %v114 = vld [vmem:[#allocation5 + $0x128] sm:$0xff]
    %v115 = vld [vmem:[#allocation5 + $0x130] sm:$0xff]
    %v116 = vld [vmem:[#allocation5 + $0x138] sm:$0xff]
    %v117 = vld [vmem:[#allocation5 + $0x140] sm:$0xff]
    %v118 = vld [vmem:[#allocation5 + $0x148] sm:$0xff]
    %v119 = vld [vmem:[#allocation5 + $0x150] sm:$0xff]
    %v120 = vld [vmem:[#allocation5 + $0x158] sm:$0xff]
    %v121 = vld [vmem:[#allocation5 + $0x160] sm:$0xff]
    %v122 = vld [vmem:[#allocation5 + $0x168] sm:$0xff]
    %v123 = vld [vmem:[#allocation5 + $0x170] sm:$0xff]
    %v124 = vld [vmem:[#allocation5 + $0x178] sm:$0xff]
    %v125 = vld [vmem:[#allocation5 + $0x180] sm:$0xff]
    %v126 = vld [vmem:[#allocation5 + $0x188] sm:$0xff]
    %v127 = vld [vmem:[#allocation5 + $0x190] sm:$0xff]
    %v128 = vld [vmem:[#allocation5 + $0x198] sm:$0xff]
    %v129 = vld [vmem:[#allocation5 + $0x1a0] sm:$0xff]
    %v130 = vld [vmem:[#allocation5 + $0x1a8] sm:$0xff]
    %v131 = vld [vmem:[#allocation5 + $0x1b0] sm:$0xff]
    %v132 = vld [vmem:[#allocation5 + $0x1b8] sm:$0xff]
    %v133 = vld [vmem:[#allocation5 + $0x1c0] sm:$0xff]
    %v134 = vld [vmem:[#allocation5 + $0x1c8] sm:$0xff]
    %v135 = vld [vmem:[#allocation5 + $0x1d0] sm:$0xff]
    %v136 = vld [vmem:[#allocation5 + $0x1d8] sm:$0xff]
    %v137 = vld [vmem:[#allocation5 + $0x1e0] sm:$0xff]
    %v138 = vld [vmem:[#allocation5 + $0x1e8] sm:$0xff]
    %v139 = vld [vmem:[#allocation5 + $0x1f0] sm:$0xff]
    %v140 = vld [vmem:[#allocation5 + $0x1f8] sm:$0xff]
    %v141 = vld [vmem:[#allocation5 + $0x200] sm:$0xff]
    %v142 = vld [vmem:[#allocation5 + $0x208] sm:$0xff]
    %v143 = vld [vmem:[#allocation5 + $0x210] sm:$0xff]
    %v144 = vld [vmem:[#allocation5 + $0x218] sm:$0xff]
    %v145 = vld [vmem:[#allocation5 + $0x220] sm:$0xff]
    %v146 = vld [vmem:[#allocation5 + $0x228] sm:$0xff]
    %v147 = vld [vmem:[#allocation5 + $0x230] sm:$0xff]
    %v148 = vld [vmem:[#allocation5 + $0x238] sm:$0xff]
    %v149 = vld [vmem:[#allocation5 + $0x240] sm:$0xff]
    %v150 = vld [vmem:[#allocation5 + $0x248] sm:$0xff]
    %v151 = vld [vmem:[#allocation5 + $0x250] sm:$0xff]
    %v152 = vld [vmem:[#allocation5 + $0x258] sm:$0xff]
    %v153 = vld [vmem:[#allocation5 + $0x260] sm:$0xff]
    %v154 = vld [vmem:[#allocation5 + $0x268] sm:$0xff]
    %v155 = vld [vmem:[#allocation5 + $0x270] sm:$0xff]
    %v156 = vld [vmem:[#allocation5 + $0x278] sm:$0xff]
    %v157 = vld [vmem:[#allocation5 + $0x280] sm:$0xff]
    %v158 = vld [vmem:[#allocation5 + $0x288] sm:$0xff]
    %v159 = vld [vmem:[#allocation5 + $0x290] sm:$0xff]
    %v160 = vld [vmem:[#allocation5 + $0x298] sm:$0xff]
    %v161 = vld [vmem:[#allocation5 + $0x2a0] sm:$0xff]
    %v162 = vld [vmem:[#allocation5 + $0x2a8] sm:$0xff]
    %v163 = vld [vmem:[#allocation5 + $0x2b0] sm:$0xff]
    %v164 = vld [vmem:[#allocation5 + $0x2b8] sm:$0xff]
    %v165 = vld [vmem:[#allocation5 + $0x2c0] sm:$0xff]
    %v166 = vld [vmem:[#allocation5 + $0x2c8] sm:$0xff]
    %v167 = vld [vmem:[#allocation5 + $0x2d0] sm:$0xff]
    %v168 = vld [vmem:[#allocation5 + $0x2d8] sm:$0xff]
    %v169 = vld [vmem:[#allocation5 + $0x2e0] sm:$0xff]
    %v170 = vld [vmem:[#allocation5 + $0x2e8] sm:$0xff]
    %v171 = vld [vmem:[#allocation5 + $0x2f0] sm:$0xff]
    %v172 = vld [vmem:[#allocation5 + $0x2f8] sm:$0xff]
    %v173 = vld [vmem:[#allocation5 + $0x300] sm:$0xff]
    %v174 = vld [vmem:[#allocation5 + $0x308] sm:$0xff]
    %v175 = vld [vmem:[#allocation5 + $0x310] sm:$0xff]
    %v176 = vld [vmem:[#allocation5 + $0x318] sm:$0xff]
    %v177 = vld [vmem:[#allocation5 + $0x320] sm:$0xff]
    %v178 = vld [vmem:[#allocation5 + $0x328] sm:$0xff]
    %v179 = vld [vmem:[#allocation5 + $0x330] sm:$0xff]
    %v180 = vld [vmem:[#allocation5 + $0x338] sm:$0xff]
    %v181 = vld [vmem:[#allocation5 + $0x340] sm:$0xff]
    %v182 = vld [vmem:[#allocation5 + $0x348] sm:$0xff]
    %v183 = vld [vmem:[#allocation5 + $0x350] sm:$0xff]
    %v184 = vld [vmem:[#allocation5 + $0x358] sm:$0xff]
    %v185 = vld [vmem:[#allocation5 + $0x360] sm:$0xff]
    %v186 = vld [vmem:[#allocation5 + $0x368] sm:$0xff]
    %v187 = vld [vmem:[#allocation5 + $0x370] sm:$0xff]
    %v188 = vld [vmem:[#allocation5 + $0x378] sm:$0xff]
    %v189 = vld [vmem:[#allocation5 + $0x380] sm:$0xff]
    %v190 = vld [vmem:[#allocation5 + $0x388] sm:$0xff]
    %v191 = vld [vmem:[#allocation5 + $0x390] sm:$0xff]
    %v192 = vld [vmem:[#allocation5 + $0x398] sm:$0xff]
    %v193 = vld [vmem:[#allocation5 + $0x3a0] sm:$0xff]
    %v194 = vld [vmem:[#allocation5 + $0x3a8] sm:$0xff]
    %v195 = vld [vmem:[#allocation5 + $0x3b0] sm:$0xff]
    %v196 = vld [vmem:[#allocation5 + $0x3b8] sm:$0xff]
    %v197 = vld [vmem:[#allocation5 + $0x3c0] sm:$0xff]
    %v198 = vld [vmem:[#allocation5 + $0x3c8] sm:$0xff]
    %v199 = vld [vmem:[#allocation5 + $0x3d0] sm:$0xff]
    %v200 = vld [vmem:[#allocation5 + $0x3d8] sm:$0xff]
    %v201 = vld [vmem:[#allocation5 + $0x3e0] sm:$0xff]
    %v202 = vld [vmem:[#allocation5 + $0x3e8] sm:$0xff]
    %v203 = vld [vmem:[#allocation5 + $0x3f0] sm:$0xff]
    %v204 = vld [vmem:[#allocation5 + $0x3f8] sm:$0xff]
    %v205 = vld [vmem:[#allocation5 + $0x400] sm:$0xff]
    %v206 = vld [vmem:[#allocation5 + $0x408] sm:$0xff]
    %v207 = vld [vmem:[#allocation5 + $0x410] sm:$0xff]
    %v208 = vld [vmem:[#allocation5 + $0x418] sm:$0xff]
    %v209 = vld [vmem:[#allocation5 + $0x420] sm:$0xff]
    %v210 = vld [vmem:[#allocation5 + $0x428] sm:$0xff]
    %v211 = vld [vmem:[#allocation5 + $0x430] sm:$0xff]
    %v212 = vld [vmem:[#allocation5 + $0x438] sm:$0xff]
    %v213 = vld [vmem:[#allocation5 + $0x440] sm:$0xff]
    %v214 = vld [vmem:[#allocation5 + $0x448] sm:$0xff]
    %v215 = vld [vmem:[#allocation5 + $0x450] sm:$0xff]
    %v216 = vld [vmem:[#allocation5 + $0x458] sm:$0xff]
    %v217 = vld [vmem:[#allocation5 + $0x460] sm:$0xff]
    %v218 = vld [vmem:[#allocation5 + $0x468] sm:$0xff]
    %v219 = vld [vmem:[#allocation5 + $0x470] sm:$0xff]
    %v220 = vld [vmem:[#allocation5 + $0x478] sm:$0xff]
    %v221 = vld [vmem:[#allocation5 + $0x480] sm:$0xff]
    %v222 = vld [vmem:[#allocation5 + $0x488] sm:$0xff]
    %v223 = vld [vmem:[#allocation5 + $0x490] sm:$0xff]
    %v224 = vld [vmem:[#allocation5 + $0x498] sm:$0xff]
    %v225 = vld [vmem:[#allocation5 + $0x4a0] sm:$0xff]
    %v226 = vld [vmem:[#allocation5 + $0x4a8] sm:$0xff]
    %v227 = vld [vmem:[#allocation5 + $0x4b0] sm:$0xff]
    %v228 = vld [vmem:[#allocation5 + $0x4b8] sm:$0xff]
    %v229 = vld [vmem:[#allocation5 + $0x4c0] sm:$0xff]
    %v230 = vld [vmem:[#allocation5 + $0x4c8] sm:$0xff]
    %v231 = vld [vmem:[#allocation5 + $0x4d0] sm:$0xff]
    %v232 = vld [vmem:[#allocation5 + $0x4d8] sm:$0xff]
    %v233 = vld [vmem:[#allocation5 + $0x4e0] sm:$0xff]
    %v234 = vld [vmem:[#allocation5 + $0x4e8] sm:$0xff]
    %v235 = vld [vmem:[#allocation5 + $0x4f0] sm:$0xff]
    %v236 = vld [vmem:[#allocation5 + $0x4f8] sm:$0xff]
    %v237 = vld [vmem:[#allocation5 + $0x500] sm:$0xff]
    %v238 = vld [vmem:[#allocation5 + $0x508] sm:$0xff]
    %v239 = vld [vmem:[#allocation5 + $0x510] sm:$0xff]
    %v240 = vld [vmem:[#allocation5 + $0x518] sm:$0xff]
    %v241 = vld [vmem:[#allocation5 + $0x520] sm:$0xff]
    %v242 = vld [vmem:[#allocation5 + $0x528] sm:$0xff]
    %v243 = vld [vmem:[#allocation5 + $0x530] sm:$0xff]
    %v244 = vld [vmem:[#allocation5 + $0x538] sm:$0xff]
    %v245 = vld [vmem:[#allocation5 + $0x540] sm:$0xff]
    %v246 = vld [vmem:[#allocation5 + $0x548] sm:$0xff]
    %v247 = vld [vmem:[#allocation5 + $0x550] sm:$0xff]
    %v248 = vld [vmem:[#allocation5 + $0x558] sm:$0xff]
    %v249 = vld [vmem:[#allocation5 + $0x560] sm:$0xff]
    %v250 = vld [vmem:[#allocation5 + $0x568] sm:$0xff]
    %v251 = vld [vmem:[#allocation5 + $0x570] sm:$0xff]
    %v252 = vld [vmem:[#allocation5 + $0x578] sm:$0xff]
    %v253 = vld [vmem:[#allocation5 + $0x580] sm:$0xff]
    %v254 = vld [vmem:[#allocation5 + $0x588] sm:$0xff]
    %v255 = vld [vmem:[#allocation5 + $0x590] sm:$0xff]
    %v256 = vld [vmem:[#allocation5 + $0x598] sm:$0xff]
    %v257 = vld [vmem:[#allocation5 + $0x5a0] sm:$0xff]
    %v258 = vld [vmem:[#allocation5 + $0x5a8] sm:$0xff]
    %v259 = vld [vmem:[#allocation5 + $0x5b0] sm:$0xff]
    %v260 = vld [vmem:[#allocation5 + $0x5b8] sm:$0xff]
    %v261 = vld [vmem:[#allocation5 + $0x5c0] sm:$0xff]
    %v262 = vld [vmem:[#allocation5 + $0x5c8] sm:$0xff]
    %v263 = vld [vmem:[#allocation5 + $0x5d0] sm:$0xff]
    %v264 = vld [vmem:[#allocation5 + $0x5d8] sm:$0xff]
    %v265 = vld [vmem:[#allocation5 + $0x5e0] sm:$0xff]
    %v266 = vld [vmem:[#allocation5 + $0x5e8] sm:$0xff]
    %v267 = vld [vmem:[#allocation5 + $0x5f0] sm:$0xff]
    %v268 = vld [vmem:[#allocation5 + $0x5f8] sm:$0xff]
    %v269 = vld [vmem:[#allocation5 + $0x600] sm:$0xff]
    %v270 = vld [vmem:[#allocation5 + $0x608] sm:$0xff]
    %v271 = vld [vmem:[#allocation5 + $0x610] sm:$0xff]
    %v272 = vld [vmem:[#allocation5 + $0x618] sm:$0xff]
    %v273 = vld [vmem:[%s2] sm:$0xf]
    %v275 = vlaneseq
    %v276 = vshrl.u32 %v275, 7
    %v277 = vsub.s32 0, %v276
    %v278 = vrot.slane %v273, %v277
    %v279 = vlaneseq
    %v280 = vshrl.u32 %v279, 7
    %v281 = vsub.s32 1, %v280
    %v282 = vrot.slane %v273, %v281
    %v283 = vlaneseq
    %v284 = vshrl.u32 %v283, 7
    %v285 = vsub.s32 2, %v284
    %v286 = vrot.slane %v273, %v285
    %v287 = vlaneseq
    %v288 = vshrl.u32 %v287, 7
    %v289 = vsub.s32 3, %v288
    %v290 = vrot.slane %v273, %v289
    %v303 = vunpack.c.l.b16 %v69
    %v304 = vunpack.c.h.b16 %v69
    %v305 = vunpack.c.l.b16 %v70
    %v306 = vunpack.c.h.b16 %v70
    %v307 = vunpack.c.l.b16 %v71
    %v308 = vunpack.c.h.b16 %v71
    %v309 = vunpack.c.l.b16 %v72
    %v310 = vunpack.c.l.b16 %v73
    %v311 = vunpack.c.h.b16 %v73
    %v312 = vunpack.c.l.b16 %v74
    %v313 = vunpack.c.h.b16 %v74
    %v314 = vunpack.c.l.b16 %v75
    %v315 = vunpack.c.h.b16 %v75
    %v316 = vunpack.c.l.b16 %v76
    %v317 = vpack.c.b16 %v310, %v303
    %v318 = vpack.c.b16 %v311, %v304
    %v319 = vpack.c.b16 %v312, %v305
    %v320 = vpack.c.b16 %v313, %v306
    %v321 = vpack.c.b16 %v314, %v307
    %v322 = vpack.c.b16 %v315, %v308
    %v323 = vpack.c.b16 %v316, %v309
    %v526 = vunpack.c.l.b16 %v77
    %v527 = vunpack.c.h.b16 %v77
    %v528 = vunpack.c.l.b16 %v78
    %v529 = vunpack.c.h.b16 %v78
    %v530 = vunpack.c.l.b16 %v79
    %v531 = vunpack.c.h.b16 %v79
    %v532 = vunpack.c.l.b16 %v80
    %v533 = vunpack.c.h.b16 %v80
    %v534 = vunpack.c.l.b16 %v81
    %v535 = vunpack.c.h.b16 %v81
    %v536 = vunpack.c.l.b16 %v82
    %v537 = vunpack.c.h.b16 %v82
    %v538 = vunpack.c.l.b16 %v83
    %v539 = vunpack.c.h.b16 %v83
    %v540 = vunpack.c.l.b16 %v84
    %v541 = vunpack.c.h.b16 %v84
    %v542 = vunpack.c.l.b16 %v85
    %v543 = vunpack.c.h.b16 %v85
    %v544 = vunpack.c.l.b16 %v86
    %v545 = vunpack.c.h.b16 %v86
    %v546 = vunpack.c.l.b16 %v87
    %v547 = vunpack.c.h.b16 %v87
    %v548 = vunpack.c.l.b16 %v88
    %v549 = vunpack.c.h.b16 %v88
    %v550 = vunpack.c.l.b16 %v89
    %v551 = vunpack.c.h.b16 %v89
    %v552 = vunpack.c.l.b16 %v90
    %v553 = vunpack.c.h.b16 %v90
    %v554 = vunpack.c.l.b16 %v91
    %v555 = vunpack.c.h.b16 %v91
    %v556 = vunpack.c.l.b16 %v92
    %v557 = vunpack.c.h.b16 %v92
    %v558 = vunpack.c.l.b16 %v93
    %v559 = vunpack.c.h.b16 %v93
    %v560 = vunpack.c.l.b16 %v94
    %v561 = vunpack.c.h.b16 %v94
    %v562 = vunpack.c.l.b16 %v95
    %v563 = vunpack.c.h.b16 %v95
    %v564 = vunpack.c.l.b16 %v96
    %v565 = vunpack.c.h.b16 %v96
    %v566 = vunpack.c.l.b16 %v97
    %v567 = vunpack.c.h.b16 %v97
    %v568 = vunpack.c.l.b16 %v98
    %v569 = vunpack.c.h.b16 %v98
    %v570 = vunpack.c.l.b16 %v99
    %v571 = vunpack.c.h.b16 %v99
    %v572 = vunpack.c.l.b16 %v100
    %v573 = vunpack.c.h.b16 %v100
    %v574 = vunpack.c.l.b16 %v101
    %v575 = vunpack.c.h.b16 %v101
    %v576 = vunpack.c.l.b16 %v102
    %v577 = vunpack.c.h.b16 %v102
    %v578 = vunpack.c.l.b16 %v103
    %v579 = vunpack.c.h.b16 %v103
    %v580 = vunpack.c.l.b16 %v104
    %v581 = vunpack.c.h.b16 %v104
    %v582 = vunpack.c.l.b16 %v105
    %v583 = vunpack.c.h.b16 %v105
    %v584 = vunpack.c.l.b16 %v106
    %v585 = vunpack.c.h.b16 %v106
    %v586 = vunpack.c.l.b16 %v107
    %v587 = vunpack.c.h.b16 %v107
    %v588 = vunpack.c.l.b16 %v108
    %v589 = vunpack.c.h.b16 %v108
    %v590 = vunpack.c.l.b16 %v109
    %v591 = vunpack.c.h.b16 %v109
    %v592 = vunpack.c.l.b16 %v110
    %v593 = vunpack.c.h.b16 %v110
    %v594 = vunpack.c.l.b16 %v111
    %v595 = vunpack.c.h.b16 %v111
    %v596 = vunpack.c.l.b16 %v112
    %v597 = vunpack.c.h.b16 %v112
    %v598 = vunpack.c.l.b16 %v113
    %v599 = vunpack.c.h.b16 %v113
    %v600 = vunpack.c.l.b16 %v114
    %v601 = vunpack.c.h.b16 %v114
    %v602 = vunpack.c.l.b16 %v115
    %v603 = vunpack.c.h.b16 %v115
    %v604 = vunpack.c.l.b16 %v116
    %v605 = vunpack.c.h.b16 %v116
    %v606 = vunpack.c.l.b16 %v117
    %v607 = vunpack.c.h.b16 %v117
    %v608 = vunpack.c.l.b16 %v118
    %v609 = vunpack.c.h.b16 %v118
    %v610 = vunpack.c.l.b16 %v119
    %v611 = vunpack.c.h.b16 %v119
    %v612 = vunpack.c.l.b16 %v120
    %v613 = vunpack.c.h.b16 %v120
    %v614 = vunpack.c.l.b16 %v121
    %v615 = vunpack.c.h.b16 %v121
    %v616 = vunpack.c.l.b16 %v122
    %v617 = vunpack.c.h.b16 %v122
    %v618 = vunpack.c.l.b16 %v123
    %v619 = vunpack.c.h.b16 %v123
    %v620 = vunpack.c.l.b16 %v124
    %v621 = vunpack.c.h.b16 %v124
    %v622 = vunpack.c.l.b16 %v125
    %v623 = vunpack.c.h.b16 %v125
    %v624 = vunpack.c.l.b16 %v126
    %v625 = vunpack.c.h.b16 %v126
    %v626 = vunpack.c.l.b16 %v127
    %v627 = vunpack.c.h.b16 %v127
    %v628 = vunpack.c.l.b16 %v128
    %v629 = vunpack.c.h.b16 %v128
    %v630 = vunpack.c.l.b16 %v129
    %v631 = vunpack.c.h.b16 %v129
    %v632 = vunpack.c.l.b16 %v130
    %v633 = vunpack.c.h.b16 %v130
    %v634 = vunpack.c.l.b16 %v131
    %v635 = vunpack.c.h.b16 %v131
    %v636 = vunpack.c.l.b16 %v132
    %v637 = vunpack.c.h.b16 %v132
    %v638 = vunpack.c.l.b16 %v133
    %v639 = vunpack.c.h.b16 %v133
    %v640 = vunpack.c.l.b16 %v134
    %v641 = vunpack.c.h.b16 %v134
    %v642 = vunpack.c.l.b16 %v135
    %v643 = vunpack.c.h.b16 %v135
    %v644 = vunpack.c.l.b16 %v136
    %v645 = vunpack.c.h.b16 %v136
    %v646 = vunpack.c.l.b16 %v137
    %v647 = vunpack.c.h.b16 %v137
    %v648 = vunpack.c.l.b16 %v138
    %v649 = vunpack.c.h.b16 %v138
    %v650 = vunpack.c.l.b16 %v139
    %v651 = vunpack.c.h.b16 %v139
    %v652 = vunpack.c.l.b16 %v140
    %v653 = vunpack.c.h.b16 %v140
    %v654 = vunpack.c.l.b16 %v141
    %v655 = vunpack.c.h.b16 %v141
    %v656 = vunpack.c.l.b16 %v142
    %v657 = vunpack.c.h.b16 %v142
    %v658 = vunpack.c.l.b16 %v143
    %v659 = vunpack.c.h.b16 %v143
    %v660 = vunpack.c.l.b16 %v144
    %v661 = vunpack.c.h.b16 %v144
    %v662 = vunpack.c.l.b16 %v145
    %v663 = vunpack.c.h.b16 %v145
    %v664 = vunpack.c.l.b16 %v146
    %v665 = vunpack.c.h.b16 %v146
    %v666 = vunpack.c.l.b16 %v147
    %v667 = vunpack.c.h.b16 %v147
    %v668 = vunpack.c.l.b16 %v148
    %v669 = vunpack.c.h.b16 %v148
    %v670 = vunpack.c.l.b16 %v149
    %v671 = vunpack.c.h.b16 %v149
    %v672 = vunpack.c.l.b16 %v150
    %v673 = vunpack.c.h.b16 %v150
    %v674 = vunpack.c.l.b16 %v151
    %v675 = vunpack.c.h.b16 %v151
    %v676 = vunpack.c.l.b16 %v152
    %v677 = vunpack.c.h.b16 %v152
    %v678 = vunpack.c.l.b16 %v153
    %v679 = vunpack.c.h.b16 %v153
    %v680 = vunpack.c.l.b16 %v154
    %v681 = vunpack.c.h.b16 %v154
    %v682 = vunpack.c.l.b16 %v155
    %v683 = vunpack.c.h.b16 %v155
    %v684 = vunpack.c.l.b16 %v156
    %v685 = vunpack.c.h.b16 %v156
    %v686 = vunpack.c.l.b16 %v157
    %v687 = vunpack.c.h.b16 %v157
    %v688 = vunpack.c.l.b16 %v158
    %v689 = vunpack.c.h.b16 %v158
    %v690 = vunpack.c.l.b16 %v159
    %v691 = vunpack.c.h.b16 %v159
    %v692 = vunpack.c.l.b16 %v160
    %v693 = vunpack.c.h.b16 %v160
    %v694 = vunpack.c.l.b16 %v161
    %v695 = vunpack.c.h.b16 %v161
    %v696 = vunpack.c.l.b16 %v162
    %v697 = vunpack.c.h.b16 %v162
    %v698 = vunpack.c.l.b16 %v163
    %v699 = vunpack.c.h.b16 %v163
    %v700 = vunpack.c.l.b16 %v164
    %v701 = vunpack.c.h.b16 %v164
    %v702 = vunpack.c.l.b16 %v165
    %v703 = vunpack.c.h.b16 %v165
    %v704 = vunpack.c.l.b16 %v166
    %v705 = vunpack.c.h.b16 %v166
    %v706 = vunpack.c.l.b16 %v167
    %v707 = vunpack.c.h.b16 %v167
    %v708 = vunpack.c.l.b16 %v168
    %v709 = vunpack.c.h.b16 %v168
    %v710 = vunpack.c.l.b16 %v169
    %v711 = vunpack.c.h.b16 %v169
    %v712 = vunpack.c.l.b16 %v170
    %v713 = vunpack.c.h.b16 %v170
    %v714 = vunpack.c.l.b16 %v171
    %v715 = vunpack.c.h.b16 %v171
    %v716 = vunpack.c.l.b16 %v172
    %v717 = vunpack.c.h.b16 %v172
    %v718 = vunpack.c.l.b16 %v173
    %v719 = vunpack.c.h.b16 %v173
    %v720 = vunpack.c.l.b16 %v174
    %v721 = vunpack.c.h.b16 %v174
    %v722 = vunpack.c.l.b16 %v175
    %v723 = vunpack.c.h.b16 %v175
    %v724 = vunpack.c.l.b16 %v176
    %v725 = vunpack.c.h.b16 %v176
    %v726 = vunpack.c.l.b16 %v177
    %v727 = vunpack.c.h.b16 %v177
    %v728 = vunpack.c.l.b16 %v178
    %v729 = vunpack.c.h.b16 %v178
    %v730 = vunpack.c.l.b16 %v179
    %v731 = vunpack.c.h.b16 %v179
    %v732 = vunpack.c.l.b16 %v180
    %v733 = vunpack.c.h.b16 %v180
    %v734 = vunpack.c.l.b16 %v181
    %v735 = vunpack.c.h.b16 %v181
    %v736 = vunpack.c.l.b16 %v182
    %v737 = vunpack.c.h.b16 %v182
    %v738 = vunpack.c.l.b16 %v183
    %v739 = vunpack.c.h.b16 %v183
    %v740 = vunpack.c.l.b16 %v184
    %v741 = vunpack.c.h.b16 %v184
    %v742 = vunpack.c.l.b16 %v185
    %v743 = vunpack.c.h.b16 %v185
    %v744 = vunpack.c.l.b16 %v186
    %v745 = vunpack.c.h.b16 %v186
    %v746 = vunpack.c.l.b16 %v187
    %v747 = vunpack.c.h.b16 %v187
    %v748 = vunpack.c.l.b16 %v188
    %v749 = vunpack.c.h.b16 %v188
    %v750 = vunpack.c.l.b16 %v189
    %v751 = vunpack.c.h.b16 %v189
    %v752 = vunpack.c.l.b16 %v190
    %v753 = vunpack.c.h.b16 %v190
    %v754 = vunpack.c.l.b16 %v191
    %v755 = vunpack.c.h.b16 %v191
    %v756 = vunpack.c.l.b16 %v192
    %v757 = vunpack.c.h.b16 %v192
    %v758 = vunpack.c.l.b16 %v193
    %v759 = vunpack.c.h.b16 %v193
    %v760 = vunpack.c.l.b16 %v194
    %v761 = vunpack.c.h.b16 %v194
    %v762 = vunpack.c.l.b16 %v195
    %v763 = vunpack.c.h.b16 %v195
    %v764 = vunpack.c.l.b16 %v196
    %v765 = vunpack.c.h.b16 %v196
    %v766 = vunpack.c.l.b16 %v197
    %v767 = vunpack.c.h.b16 %v197
    %v768 = vunpack.c.l.b16 %v198
    %v769 = vunpack.c.h.b16 %v198
    %v770 = vunpack.c.l.b16 %v199
    %v771 = vunpack.c.h.b16 %v199
    %v772 = vunpack.c.l.b16 %v200
    %v773 = vunpack.c.h.b16 %v200
    %v774 = vunpack.c.l.b16 %v201
    %v775 = vunpack.c.h.b16 %v201
    %v776 = vunpack.c.l.b16 %v202
    %v777 = vunpack.c.h.b16 %v202
    %v778 = vunpack.c.l.b16 %v203
    %v779 = vunpack.c.h.b16 %v203
    %v780 = vunpack.c.l.b16 %v204
    %v781 = vunpack.c.h.b16 %v204
    %v782 = vunpack.c.l.b16 %v205
    %v783 = vunpack.c.h.b16 %v205
    %v784 = vunpack.c.l.b16 %v206
    %v785 = vunpack.c.h.b16 %v206
    %v786 = vunpack.c.l.b16 %v207
    %v787 = vunpack.c.h.b16 %v207
    %v788 = vunpack.c.l.b16 %v208
    %v789 = vunpack.c.h.b16 %v208
    %v790 = vunpack.c.l.b16 %v209
    %v791 = vunpack.c.h.b16 %v209
    %v792 = vunpack.c.l.b16 %v210
    %v793 = vunpack.c.h.b16 %v210
    %v794 = vunpack.c.l.b16 %v211
    %v795 = vunpack.c.h.b16 %v211
    %v796 = vunpack.c.l.b16 %v212
    %v797 = vunpack.c.h.b16 %v212
    %v798 = vunpack.c.l.b16 %v213
    %v799 = vunpack.c.h.b16 %v213
    %v800 = vunpack.c.l.b16 %v214
    %v801 = vunpack.c.h.b16 %v214
    %v802 = vunpack.c.l.b16 %v215
    %v803 = vunpack.c.h.b16 %v215
    %v804 = vunpack.c.l.b16 %v216
    %v805 = vunpack.c.h.b16 %v216
    %v806 = vunpack.c.l.b16 %v217
    %v807 = vunpack.c.h.b16 %v217
    %v808 = vunpack.c.l.b16 %v218
    %v809 = vunpack.c.h.b16 %v218
    %v810 = vunpack.c.l.b16 %v219
    %v811 = vunpack.c.h.b16 %v219
    %v812 = vunpack.c.l.b16 %v220
    %v813 = vunpack.c.h.b16 %v220
    %v814 = vunpack.c.l.b16 %v221
    %v815 = vunpack.c.h.b16 %v221
    %v816 = vunpack.c.l.b16 %v222
    %v817 = vunpack.c.h.b16 %v222
    %v818 = vunpack.c.l.b16 %v223
    %v819 = vunpack.c.h.b16 %v223
    %v820 = vunpack.c.l.b16 %v224
    %v821 = vunpack.c.h.b16 %v224
    %v822 = vunpack.c.l.b16 %v225
    %v823 = vunpack.c.h.b16 %v225
    %v824 = vunpack.c.l.b16 %v226
    %v825 = vunpack.c.h.b16 %v226
    %v826 = vunpack.c.l.b16 %v227
    %v827 = vunpack.c.h.b16 %v227
    %v828 = vunpack.c.l.b16 %v228
    %v829 = vunpack.c.h.b16 %v228
    %v830 = vunpack.c.l.b16 %v229
    %v831 = vunpack.c.h.b16 %v229
    %v832 = vunpack.c.l.b16 %v230
    %v833 = vunpack.c.h.b16 %v230
    %v834 = vunpack.c.l.b16 %v231
    %v835 = vunpack.c.h.b16 %v231
    %v836 = vunpack.c.l.b16 %v232
    %v837 = vunpack.c.h.b16 %v232
    %v838 = vunpack.c.l.b16 %v233
    %v839 = vunpack.c.h.b16 %v233
    %v840 = vunpack.c.l.b16 %v234
    %v841 = vunpack.c.h.b16 %v234
    %v842 = vunpack.c.l.b16 %v235
    %v843 = vunpack.c.h.b16 %v235
    %v844 = vunpack.c.l.b16 %v236
    %v845 = vunpack.c.h.b16 %v236
    %v846 = vunpack.c.l.b16 %v237
    %v847 = vunpack.c.h.b16 %v237
    %v848 = vunpack.c.l.b16 %v238
    %v849 = vunpack.c.h.b16 %v238
    %v850 = vunpack.c.l.b16 %v239
    %v851 = vunpack.c.h.b16 %v239
    %v852 = vunpack.c.l.b16 %v240
    %v853 = vunpack.c.h.b16 %v240
    %v854 = vunpack.c.l.b16 %v241
    %v855 = vunpack.c.h.b16 %v241
    %v856 = vunpack.c.l.b16 %v242
    %v857 = vunpack.c.h.b16 %v242
    %v858 = vunpack.c.l.b16 %v243
    %v859 = vunpack.c.h.b16 %v243
    %v860 = vunpack.c.l.b16 %v244
    %v861 = vunpack.c.h.b16 %v244
    %v862 = vunpack.c.l.b16 %v245
    %v863 = vunpack.c.h.b16 %v245
    %v864 = vunpack.c.l.b16 %v246
    %v865 = vunpack.c.h.b16 %v246
    %v866 = vunpack.c.l.b16 %v247
    %v867 = vunpack.c.h.b16 %v247
    %v868 = vunpack.c.l.b16 %v248
    %v869 = vunpack.c.h.b16 %v248
    %v870 = vunpack.c.l.b16 %v249
    %v871 = vunpack.c.h.b16 %v249
    %v872 = vunpack.c.l.b16 %v250
    %v873 = vunpack.c.h.b16 %v250
    %v874 = vunpack.c.l.b16 %v251
    %v875 = vunpack.c.h.b16 %v251
    %v876 = vunpack.c.l.b16 %v252
    %v877 = vunpack.c.h.b16 %v252
    %v878 = vunpack.c.l.b16 %v253
    %v879 = vunpack.c.h.b16 %v253
    %v880 = vunpack.c.l.b16 %v254
    %v881 = vunpack.c.h.b16 %v254
    %v882 = vunpack.c.l.b16 %v255
    %v883 = vunpack.c.h.b16 %v255
    %v884 = vunpack.c.l.b16 %v256
    %v885 = vunpack.c.h.b16 %v256
    %v886 = vunpack.c.l.b16 %v257
    %v887 = vunpack.c.h.b16 %v257
    %v888 = vunpack.c.l.b16 %v258
    %v889 = vunpack.c.h.b16 %v258
    %v890 = vunpack.c.l.b16 %v259
    %v891 = vunpack.c.h.b16 %v259
    %v892 = vunpack.c.l.b16 %v260
    %v893 = vunpack.c.h.b16 %v260
    %v894 = vunpack.c.l.b16 %v261
    %v895 = vunpack.c.h.b16 %v261
    %v896 = vunpack.c.l.b16 %v262
    %v897 = vunpack.c.h.b16 %v262
    %v898 = vunpack.c.l.b16 %v263
    %v899 = vunpack.c.h.b16 %v263
    %v900 = vunpack.c.l.b16 %v264
    %v901 = vunpack.c.h.b16 %v264
    %v902 = vunpack.c.l.b16 %v265
    %v903 = vunpack.c.h.b16 %v265
    %v904 = vunpack.c.l.b16 %v266
    %v905 = vunpack.c.h.b16 %v266
    %v906 = vunpack.c.l.b16 %v267
    %v907 = vunpack.c.h.b16 %v267
    %v908 = vunpack.c.l.b16 %v268
    %v909 = vunpack.c.h.b16 %v268
    %v910 = vunpack.c.l.b16 %v269
    %v911 = vunpack.c.h.b16 %v269
    %v912 = vunpack.c.l.b16 %v270
    %v913 = vunpack.c.h.b16 %v270
    %v914 = vunpack.c.l.b16 %v271
    %v915 = vunpack.c.h.b16 %v271
    %v916 = vunpack.c.l.b16 %v272
    %v917 = vunpack.c.h.b16 %v272
    %v918 = vpack.c.b16 %v530, %v526
    %v919 = vpack.c.b16 %v531, %v527
    %v920 = vpack.c.b16 %v532, %v528
    %v921 = vpack.c.b16 %v533, %v529
    %v922 = vpack.c.b16 %v538, %v534
    %v923 = vpack.c.b16 %v539, %v535
    %v924 = vpack.c.b16 %v540, %v536
    %v925 = vpack.c.b16 %v541, %v537
    %v926 = vpack.c.b16 %v546, %v542
    %v927 = vpack.c.b16 %v547, %v543
    %v928 = vpack.c.b16 %v548, %v544
    %v929 = vpack.c.b16 %v549, %v545
    %v930 = vpack.c.b16 %v554, %v550
    %v931 = vpack.c.b16 %v555, %v551
    %v932 = vpack.c.b16 %v556, %v552
    %v933 = vpack.c.b16 %v557, %v553
    %v934 = vpack.c.b16 %v562, %v558
    %v935 = vpack.c.b16 %v563, %v559
    %v936 = vpack.c.b16 %v564, %v560
    %v937 = vpack.c.b16 %v565, %v561
    %v938 = vpack.c.b16 %v570, %v566
    %v939 = vpack.c.b16 %v571, %v567
    %v940 = vpack.c.b16 %v572, %v568
    %v941 = vpack.c.b16 %v573, %v569
    %v942 = vpack.c.b16 %v578, %v574
    %v943 = vpack.c.b16 %v579, %v575
    %v944 = vpack.c.b16 %v580, %v576
    %v945 = vpack.c.b16 %v581, %v577
    %v946 = vpack.c.b16 %v586, %v582
    %v947 = vpack.c.b16 %v587, %v583
    %v948 = vpack.c.b16 %v588, %v584
    %v949 = vpack.c.b16 %v589, %v585
    %v950 = vpack.c.b16 %v594, %v590
    %v951 = vpack.c.b16 %v595, %v591
    %v952 = vpack.c.b16 %v596, %v592
    %v953 = vpack.c.b16 %v597, %v593
    %v954 = vpack.c.b16 %v602, %v598
    %v955 = vpack.c.b16 %v603, %v599
    %v956 = vpack.c.b16 %v604, %v600
    %v957 = vpack.c.b16 %v605, %v601
    %v958 = vpack.c.b16 %v610, %v606
    %v959 = vpack.c.b16 %v611, %v607
    %v960 = vpack.c.b16 %v612, %v608
    %v961 = vpack.c.b16 %v613, %v609
    %v962 = vpack.c.b16 %v618, %v614
    %v963 = vpack.c.b16 %v619, %v615
    %v964 = vpack.c.b16 %v620, %v616
    %v965 = vpack.c.b16 %v621, %v617
    %v966 = vpack.c.b16 %v626, %v622
    %v967 = vpack.c.b16 %v627, %v623
    %v968 = vpack.c.b16 %v628, %v624
    %v969 = vpack.c.b16 %v629, %v625
    %v970 = vpack.c.b16 %v634, %v630
    %v971 = vpack.c.b16 %v635, %v631
    %v972 = vpack.c.b16 %v636, %v632
    %v973 = vpack.c.b16 %v637, %v633
    %v974 = vpack.c.b16 %v642, %v638
    %v975 = vpack.c.b16 %v643, %v639
    %v976 = vpack.c.b16 %v644, %v640
    %v977 = vpack.c.b16 %v645, %v641
    %v978 = vpack.c.b16 %v650, %v646
    %v979 = vpack.c.b16 %v651, %v647
    %v980 = vpack.c.b16 %v652, %v648
    %v981 = vpack.c.b16 %v653, %v649
    %v982 = vpack.c.b16 %v658, %v654
    %v983 = vpack.c.b16 %v659, %v655
    %v984 = vpack.c.b16 %v660, %v656
    %v985 = vpack.c.b16 %v661, %v657
    %v986 = vpack.c.b16 %v666, %v662
    %v987 = vpack.c.b16 %v667, %v663
    %v988 = vpack.c.b16 %v668, %v664
    %v989 = vpack.c.b16 %v669, %v665
    %v990 = vpack.c.b16 %v674, %v670
    %v991 = vpack.c.b16 %v675, %v671
    %v992 = vpack.c.b16 %v676, %v672
    %v993 = vpack.c.b16 %v677, %v673
    %v994 = vpack.c.b16 %v682, %v678
    %v995 = vpack.c.b16 %v683, %v679
    %v996 = vpack.c.b16 %v684, %v680
    %v997 = vpack.c.b16 %v685, %v681
    %v998 = vpack.c.b16 %v690, %v686
    %v999 = vpack.c.b16 %v691, %v687
    %v1000 = vpack.c.b16 %v692, %v688
    %v1001 = vpack.c.b16 %v693, %v689
    %v1002 = vpack.c.b16 %v698, %v694
    %v1003 = vpack.c.b16 %v699, %v695
    %v1004 = vpack.c.b16 %v700, %v696
    %v1005 = vpack.c.b16 %v701, %v697
    %v1006 = vpack.c.b16 %v706, %v702
    %v1007 = vpack.c.b16 %v707, %v703
    %v1008 = vpack.c.b16 %v708, %v704
    %v1009 = vpack.c.b16 %v709, %v705
    %v1010 = vpack.c.b16 %v714, %v710
    %v1011 = vpack.c.b16 %v715, %v711
    %v1012 = vpack.c.b16 %v716, %v712
    %v1013 = vpack.c.b16 %v717, %v713
    %v1014 = vpack.c.b16 %v722, %v718
    %v1015 = vpack.c.b16 %v723, %v719
    %v1016 = vpack.c.b16 %v724, %v720
    %v1017 = vpack.c.b16 %v725, %v721
    %v1018 = vpack.c.b16 %v730, %v726
    %v1019 = vpack.c.b16 %v731, %v727
    %v1020 = vpack.c.b16 %v732, %v728
    %v1021 = vpack.c.b16 %v733, %v729
    %v1022 = vpack.c.b16 %v738, %v734
    %v1023 = vpack.c.b16 %v739, %v735
    %v1024 = vpack.c.b16 %v740, %v736
    %v1025 = vpack.c.b16 %v741, %v737
    %v1026 = vpack.c.b16 %v746, %v742
    %v1027 = vpack.c.b16 %v747, %v743
    %v1028 = vpack.c.b16 %v748, %v744
    %v1029 = vpack.c.b16 %v749, %v745
    %v1030 = vpack.c.b16 %v754, %v750
    %v1031 = vpack.c.b16 %v755, %v751
    %v1032 = vpack.c.b16 %v756, %v752
    %v1033 = vpack.c.b16 %v757, %v753
    %v1034 = vpack.c.b16 %v762, %v758
    %v1035 = vpack.c.b16 %v763, %v759
    %v1036 = vpack.c.b16 %v764, %v760
    %v1037 = vpack.c.b16 %v765, %v761
    %v1038 = vpack.c.b16 %v770, %v766
    %v1039 = vpack.c.b16 %v771, %v767
    %v1040 = vpack.c.b16 %v772, %v768
    %v1041 = vpack.c.b16 %v773, %v769
    %v1042 = vpack.c.b16 %v778, %v774
    %v1043 = vpack.c.b16 %v779, %v775
    %v1044 = vpack.c.b16 %v780, %v776
    %v1045 = vpack.c.b16 %v781, %v777
    %v1046 = vpack.c.b16 %v786, %v782
    %v1047 = vpack.c.b16 %v787, %v783
    %v1048 = vpack.c.b16 %v788, %v784
    %v1049 = vpack.c.b16 %v789, %v785
    %v1050 = vpack.c.b16 %v794, %v790
    %v1051 = vpack.c.b16 %v795, %v791
    %v1052 = vpack.c.b16 %v796, %v792
    %v1053 = vpack.c.b16 %v797, %v793
    %v1054 = vpack.c.b16 %v802, %v798
    %v1055 = vpack.c.b16 %v803, %v799
    %v1056 = vpack.c.b16 %v804, %v800
    %v1057 = vpack.c.b16 %v805, %v801
    %v1058 = vpack.c.b16 %v810, %v806
    %v1059 = vpack.c.b16 %v811, %v807
    %v1060 = vpack.c.b16 %v812, %v808
    %v1061 = vpack.c.b16 %v813, %v809
    %v1062 = vpack.c.b16 %v818, %v814
    %v1063 = vpack.c.b16 %v819, %v815
    %v1064 = vpack.c.b16 %v820, %v816
    %v1065 = vpack.c.b16 %v821, %v817
    %v1066 = vpack.c.b16 %v826, %v822
    %v1067 = vpack.c.b16 %v827, %v823
    %v1068 = vpack.c.b16 %v828, %v824
    %v1069 = vpack.c.b16 %v829, %v825
    %v1070 = vpack.c.b16 %v834, %v830
    %v1071 = vpack.c.b16 %v835, %v831
    %v1072 = vpack.c.b16 %v836, %v832
    %v1073 = vpack.c.b16 %v837, %v833
    %v1074 = vpack.c.b16 %v842, %v838
    %v1075 = vpack.c.b16 %v843, %v839
    %v1076 = vpack.c.b16 %v844, %v840
    %v1077 = vpack.c.b16 %v845, %v841
    %v1078 = vpack.c.b16 %v850, %v846
    %v1079 = vpack.c.b16 %v851, %v847
    %v1080 = vpack.c.b16 %v852, %v848
    %v1081 = vpack.c.b16 %v853, %v849
    %v1082 = vpack.c.b16 %v858, %v854
    %v1083 = vpack.c.b16 %v859, %v855
    %v1084 = vpack.c.b16 %v860, %v856
    %v1085 = vpack.c.b16 %v861, %v857
    %v1086 = vpack.c.b16 %v866, %v862
    %v1087 = vpack.c.b16 %v867, %v863
    %v1088 = vpack.c.b16 %v868, %v864
    %v1089 = vpack.c.b16 %v869, %v865
    %v1090 = vpack.c.b16 %v874, %v870
    %v1091 = vpack.c.b16 %v875, %v871
    %v1092 = vpack.c.b16 %v876, %v872
    %v1093 = vpack.c.b16 %v877, %v873
    %v1094 = vpack.c.b16 %v882, %v878
    %v1095 = vpack.c.b16 %v883, %v879
    %v1096 = vpack.c.b16 %v884, %v880
    %v1097 = vpack.c.b16 %v885, %v881
    %v1098 = vpack.c.b16 %v890, %v886
    %v1099 = vpack.c.b16 %v891, %v887
    %v1100 = vpack.c.b16 %v892, %v888
    %v1101 = vpack.c.b16 %v893, %v889
    %v1102 = vpack.c.b16 %v898, %v894
    %v1103 = vpack.c.b16 %v899, %v895
    %v1104 = vpack.c.b16 %v900, %v896
    %v1105 = vpack.c.b16 %v901, %v897
    %v1106 = vpack.c.b16 %v906, %v902
    %v1107 = vpack.c.b16 %v907, %v903
    %v1108 = vpack.c.b16 %v908, %v904
    %v1109 = vpack.c.b16 %v909, %v905
    %v1110 = vpack.c.b16 %v914, %v910
    %v1111 = vpack.c.b16 %v915, %v911
    %v1112 = vpack.c.b16 %v916, %v912
    %v1113 = vpack.c.b16 %v917, %v913
    %vm1310 = vcmask 130048
    %v1312 = vsel %vm1310, %v323, 0
    %1314 = vmatprep.subr.bf16.mxu0 %v919
    %1315 = vmatpush1.bf16.msra.mxu0 %v918
    %1316 = vmatprep.subr.bf16.mxu0 %v923
    %1317 = vmatpush1.bf16.msra.mxu0 %v922
    %1318 = vmatprep.subr.bf16.mxu0 %v927
    %1319 = vmatpush1.bf16.msra.mxu0 %v926
    %1320 = vmatprep.subr.bf16.mxu0 %v931
    %1321 = vmatpush1.bf16.msra.mxu0 %v930
    %1322 = vmatprep.subr.bf16.mxu0 %v935
    %1323 = vmatpush1.bf16.msra.mxu0 %v934
    %1324 = vmatprep.subr.bf16.mxu0 %v939
    %1325 = vmatpush1.bf16.msra.mxu0 %v938
    %1326 = vmatprep.subr.bf16.mxu0 %v943
    %1327 = vmatpush1.bf16.msra.mxu0 %v942
    %1328 = vmatprep.subr.bf16.mxu0 %v947
    %1329 = vmatpush1.bf16.msra.mxu0 %v946
    %1330 = vmatprep.subr.bf16.mxu0 %v951
    %1331 = vmatpush1.bf16.msra.mxu0 %v950
    %1332 = vmatprep.subr.bf16.mxu0 %v955
    %1333 = vmatpush1.bf16.msra.mxu0 %v954
    %1334 = vmatprep.subr.bf16.mxu0 %v959
    %1335 = vmatpush1.bf16.msra.mxu0 %v958
    %1336 = vmatprep.subr.bf16.mxu0 %v963
    %1337 = vmatpush1.bf16.msra.mxu0 %v962
    %1338 = vmatprep.subr.bf16.mxu0 %v967
    %1339 = vmatpush1.bf16.msra.mxu0 %v966
    %1340 = vmatprep.subr.bf16.mxu0 %v971
    %1341 = vmatpush1.bf16.msra.mxu0 %v970
    %1342 = vmatprep.subr.bf16.mxu0 %v975
    %1343 = vmatpush1.bf16.msra.mxu0 %v974
    %1344 = vmatprep.subr.bf16.mxu0 %v979
    %1345 = vmatpush1.bf16.msra.mxu0 %v978
    %1346 = vmatprep.mubr.bf16.mxu0 %v318
    %1347 = vmatmul.mubr.bf16.gmra.mrb[0].mxu0 %v317
    %v1348 = vpop.f32.mrb[0].mxu0
    %v1349 = vadd.f32 %v278, %v1348
    %v1350 = vpop.f32.mrb[0].mxu0
    %v1351 = vadd.f32 %v282, %v1350
    %v1352 = vpop.f32.mrb[0].mxu0
    %v1353 = vadd.f32 %v278, %v1352
    %v1354 = vpop.f32.mrb[0].mxu0
    %v1355 = vadd.f32 %v282, %v1354
    %1356 = vdwg.mxu0
    %1357 = vmatprep.subr.bf16.mxu0 %v983
    %1358 = vmatpush1.bf16.msra.mxu0 %v982
    %1359 = vmatprep.subr.bf16.mxu0 %v987
    %1360 = vmatpush1.bf16.msra.mxu0 %v986
    %1361 = vmatprep.subr.bf16.mxu0 %v991
    %1362 = vmatpush1.bf16.msra.mxu0 %v990
    %1363 = vmatprep.subr.bf16.mxu0 %v995
    %1364 = vmatpush1.bf16.msra.mxu0 %v994
    %1365 = vmatprep.subr.bf16.mxu0 %v999
    %1366 = vmatpush1.bf16.msra.mxu0 %v998
    %1367 = vmatprep.subr.bf16.mxu0 %v1003
    %1368 = vmatpush1.bf16.msra.mxu0 %v1002
    %1369 = vmatprep.subr.bf16.mxu0 %v1007
    %1370 = vmatpush1.bf16.msra.mxu0 %v1006
    %1371 = vmatprep.subr.bf16.mxu0 %v1011
    %1372 = vmatpush1.bf16.msra.mxu0 %v1010
    %1373 = vmatprep.subr.bf16.mxu0 %v1015
    %1374 = vmatpush1.bf16.msra.mxu0 %v1014
    %1375 = vmatprep.subr.bf16.mxu0 %v1019
    %1376 = vmatpush1.bf16.msra.mxu0 %v1018
    %1377 = vmatprep.subr.bf16.mxu0 %v1023
    %1378 = vmatpush1.bf16.msra.mxu0 %v1022
    %1379 = vmatprep.subr.bf16.mxu0 %v1027
    %1380 = vmatpush1.bf16.msra.mxu0 %v1026
    %1381 = vmatprep.subr.bf16.mxu0 %v1031
    %1382 = vmatpush1.bf16.msra.mxu0 %v1030
    %1383 = vmatprep.subr.bf16.mxu0 %v1035
    %1384 = vmatpush1.bf16.msra.mxu0 %v1034
    %1385 = vmatprep.subr.bf16.mxu0 %v1039
    %1386 = vmatpush1.bf16.msra.mxu0 %v1038
    %1387 = vmatprep.subr.bf16.mxu0 %v1043
    %1388 = vmatpush1.bf16.msra.mxu0 %v1042
    %1389 = vmatprep.mubr.bf16.mxu0 %v320
    %1390 = vmatmul.mubr.bf16.gmra.mrb[0].mxu0 %v319
    %v1391 = vpop.f32.mrb[0].mxu0
    %v1392 = vadd.f32 %v1349, %v1391
    %v1393 = vpop.f32.mrb[0].mxu0
    %v1394 = vadd.f32 %v1351, %v1393
    %v1395 = vpop.f32.mrb[0].mxu0
    %v1396 = vadd.f32 %v1353, %v1395
    %v1397 = vpop.f32.mrb[0].mxu0
    %v1398 = vadd.f32 %v1355, %v1397
    %1399 = vdwg.mxu0
    %1400 = vmatprep.subr.bf16.mxu0 %v1047
    %1401 = vmatpush1.bf16.msra.mxu0 %v1046
    %1402 = vmatprep.subr.bf16.mxu0 %v1051
    %1403 = vmatpush1.bf16.msra.mxu0 %v1050
    %1404 = vmatprep.subr.bf16.mxu0 %v1055
    %1405 = vmatpush1.bf16.msra.mxu0 %v1054
    %1406 = vmatprep.subr.bf16.mxu0 %v1059
    %1407 = vmatpush1.bf16.msra.mxu0 %v1058
    %1408 = vmatprep.subr.bf16.mxu0 %v1063
    %1409 = vmatpush1.bf16.msra.mxu0 %v1062
    %1410 = vmatprep.subr.bf16.mxu0 %v1067
    %1411 = vmatpush1.bf16.msra.mxu0 %v1066
    %1412 = vmatprep.subr.bf16.mxu0 %v1071
    %1413 = vmatpush1.bf16.msra.mxu0 %v1070
    %1414 = vmatprep.subr.bf16.mxu0 %v1075
    %1415 = vmatpush1.bf16.msra.mxu0 %v1074
    %1416 = vmatprep.subr.bf16.mxu0 %v1079
    %1417 = vmatpush1.bf16.msra.mxu0 %v1078
    %1418 = vmatprep.subr.bf16.mxu0 %v1083
    %1419 = vmatpush1.bf16.msra.mxu0 %v1082
    %1420 = vmatprep.subr.bf16.mxu0 %v1087
    %1421 = vmatpush1.bf16.msra.mxu0 %v1086
    %1422 = vmatprep.subr.bf16.mxu0 %v1091
    %1423 = vmatpush1.bf16.msra.mxu0 %v1090
    %1424 = vmatprep.subr.bf16.mxu0 %v1095
    %1425 = vmatpush1.bf16.msra.mxu0 %v1094
    %1426 = vmatprep.subr.bf16.mxu0 %v1099
    %1427 = vmatpush1.bf16.msra.mxu0 %v1098
    %1428 = vmatprep.subr.bf16.mxu0 %v1103
    %1429 = vmatpush1.bf16.msra.mxu0 %v1102
    %1430 = vmatprep.subr.bf16.mxu0 %v1107
    %1431 = vmatpush1.bf16.msra.mxu0 %v1106
    %1432 = vmatprep.mubr.bf16.mxu0 %v322
    %1433 = vmatmul.mubr.bf16.gmra.mrb[0].mxu0 %v321
    %v1434 = vpop.f32.mrb[0].mxu0
    %v1435 = vadd.f32 %v1392, %v1434
    %v1436 = vpop.f32.mrb[0].mxu0
    %v1437 = vadd.f32 %v1394, %v1436
    %v1438 = vpop.f32.mrb[0].mxu0
    %v1439 = vadd.f32 %v1396, %v1438
    %v1440 = vpop.f32.mrb[0].mxu0
    %v1441 = vadd.f32 %v1398, %v1440
    %1442 = vdwg.mxu0
    %1443 = vmatprep.subr.bf16.mxu0 %v1111
    %1444 = vmatpush1.bf16.msra.mxu0 %v1110
    %1445 = vmatprep.subr.bf16.mxu0 0
    %1446 = vmatpush1.bf16.msra.mxu0 0
    %1447 = vmatprep.subr.bf16.mxu0 0
    %1448 = vmatpush1.bf16.msra.mxu0 0
    %1449 = vmatprep.subr.bf16.mxu0 0
    %1450 = vmatpush1.bf16.msra.mxu0 0
    %1451 = vmatprep.subr.bf16.mxu0 0
    %1452 = vmatpush1.bf16.msra.mxu0 0
    %1453 = vmatprep.subr.bf16.mxu0 0
    %1454 = vmatpush1.bf16.msra.mxu0 0
    %1455 = vmatprep.subr.bf16.mxu0 0
    %1456 = vmatpush1.bf16.msra.mxu0 0
    %1457 = vmatprep.subr.bf16.mxu0 0
    %1458 = vmatpush1.bf16.msra.mxu0 0
    %1459 = vmatprep.subr.bf16.mxu0 0
    %1460 = vmatpush1.bf16.msra.mxu0 0
    %1461 = vmatprep.subr.bf16.mxu0 0
    %1462 = vmatpush1.bf16.msra.mxu0 0
    %1463 = vmatprep.subr.bf16.mxu0 0
    %1464 = vmatpush1.bf16.msra.mxu0 0
    %1465 = vmatprep.subr.bf16.mxu0 0
    %1466 = vmatpush1.bf16.msra.mxu0 0
    %1467 = vmatprep.subr.bf16.mxu0 0
    %1468 = vmatpush1.bf16.msra.mxu0 0
    %1469 = vmatprep.subr.bf16.mxu0 0
    %1470 = vmatpush1.bf16.msra.mxu0 0
    %1471 = vmatprep.subr.bf16.mxu0 0
    %1472 = vmatpush1.bf16.msra.mxu0 0
    %1473 = vmatprep.subr.bf16.mxu0 0
    %1474 = vmatpush1.bf16.msra.mxu0 0
    %1475 = vmatprep.mubr.bf16.mxu0 0
    %1476 = vmatmul.mubr.bf16.gmra.mrb[0].mxu0 %v1312
    %v1477 = vpop.f32.mrb[0].mxu0
    %v1478 = vadd.f32 %v1435, %v1477
    %v1479 = vpop.f32.mrb[0].mxu0
    %v1480 = vadd.f32 %v1437, %v1479
    %v1481 = vpop.f32.mrb[0].mxu0
    %v1482 = vadd.f32 %v1439, %v1481
    %v1483 = vpop.f32.mrb[0].mxu0
    %v1484 = vadd.f32 %v1441, %v1483
    %1485 = vdwg.mxu0
    %1486 = vmatprep.subr.bf16.mxu0 %v921
    %1487 = vmatpush1.bf16.msra.mxu0 %v920
    %1488 = vmatprep.subr.bf16.mxu0 %v925
    %1489 = vmatpush1.bf16.msra.mxu0 %v924
    %1490 = vmatprep.subr.bf16.mxu0 %v929
    %1491 = vmatpush1.bf16.msra.mxu0 %v928
    %1492 = vmatprep.subr.bf16.mxu0 %v933
    %1493 = vmatpush1.bf16.msra.mxu0 %v932
    %1494 = vmatprep.subr.bf16.mxu0 %v937
    %1495 = vmatpush1.bf16.msra.mxu0 %v936
    %1496 = vmatprep.subr.bf16.mxu0 %v941
    %1497 = vmatpush1.bf16.msra.mxu0 %v940
    %1498 = vmatprep.subr.bf16.mxu0 %v945
    %1499 = vmatpush1.bf16.msra.mxu0 %v944
    %1500 = vmatprep.subr.bf16.mxu0 %v949
    %1501 = vmatpush1.bf16.msra.mxu0 %v948
    %1502 = vmatprep.subr.bf16.mxu0 %v953
    %1503 = vmatpush1.bf16.msra.mxu0 %v952
    %1504 = vmatprep.subr.bf16.mxu0 %v957
    %1505 = vmatpush1.bf16.msra.mxu0 %v956
    %1506 = vmatprep.subr.bf16.mxu0 %v961
    %1507 = vmatpush1.bf16.msra.mxu0 %v960
    %1508 = vmatprep.subr.bf16.mxu0 %v965
    %1509 = vmatpush1.bf16.msra.mxu0 %v964
    %1510 = vmatprep.subr.bf16.mxu0 %v969
    %1511 = vmatpush1.bf16.msra.mxu0 %v968
    %1512 = vmatprep.subr.bf16.mxu0 %v973
    %1513 = vmatpush1.bf16.msra.mxu0 %v972
    %1514 = vmatprep.subr.bf16.mxu0 %v977
    %1515 = vmatpush1.bf16.msra.mxu0 %v976
    %1516 = vmatprep.subr.bf16.mxu0 %v981
    %1517 = vmatpush1.bf16.msra.mxu0 %v980
    %1518 = vmatprep.mubr.bf16.mxu0 %v318
    %1519 = vmatmul.mubr.bf16.gmra.mrb[0].mxu0 %v317
    %v1520 = vpop.f32.mrb[0].mxu0
    %v1521 = vadd.f32 %v286, %v1520
    %v1522 = vpop.f32.mrb[0].mxu0
    %v1523 = vadd.f32 %v290, %v1522
    %v1524 = vpop.f32.mrb[0].mxu0
    %v1525 = vadd.f32 %v286, %v1524
    %v1526 = vpop.f32.mrb[0].mxu0
    %v1527 = vadd.f32 %v290, %v1526
    %1528 = vdwg.mxu0
    %1529 = vmatprep.subr.bf16.mxu0 %v985
    %1530 = vmatpush1.bf16.msra.mxu0 %v984
    %1531 = vmatprep.subr.bf16.mxu0 %v989
    %1532 = vmatpush1.bf16.msra.mxu0 %v988
    %1533 = vmatprep.subr.bf16.mxu0 %v993
    %1534 = vmatpush1.bf16.msra.mxu0 %v992
    %1535 = vmatprep.subr.bf16.mxu0 %v997
    %1536 = vmatpush1.bf16.msra.mxu0 %v996
    %1537 = vmatprep.subr.bf16.mxu0 %v1001
    %1538 = vmatpush1.bf16.msra.mxu0 %v1000
    %1539 = vmatprep.subr.bf16.mxu0 %v1005
    %1540 = vmatpush1.bf16.msra.mxu0 %v1004
    %1541 = vmatprep.subr.bf16.mxu0 %v1009
    %1542 = vmatpush1.bf16.msra.mxu0 %v1008
    %1543 = vmatprep.subr.bf16.mxu0 %v1013
    %1544 = vmatpush1.bf16.msra.mxu0 %v1012
    %1545 = vmatprep.subr.bf16.mxu0 %v1017
    %1546 = vmatpush1.bf16.msra.mxu0 %v1016
    %1547 = vmatprep.subr.bf16.mxu0 %v1021
    %1548 = vmatpush1.bf16.msra.mxu0 %v1020
    %1549 = vmatprep.subr.bf16.mxu0 %v1025
    %1550 = vmatpush1.bf16.msra.mxu0 %v1024
    %1551 = vmatprep.subr.bf16.mxu0 %v1029
    %1552 = vmatpush1.bf16.msra.mxu0 %v1028
    %1553 = vmatprep.subr.bf16.mxu0 %v1033
    %1554 = vmatpush1.bf16.msra.mxu0 %v1032
    %1555 = vmatprep.subr.bf16.mxu0 %v1037
    %1556 = vmatpush1.bf16.msra.mxu0 %v1036
    %1557 = vmatprep.subr.bf16.mxu0 %v1041
    %1558 = vmatpush1.bf16.msra.mxu0 %v1040
    %1559 = vmatprep.subr.bf16.mxu0 %v1045
    %1560 = vmatpush1.bf16.msra.mxu0 %v1044
    %1561 = vmatprep.mubr.bf16.mxu0 %v320
    %1562 = vmatmul.mubr.bf16.gmra.mrb[0].mxu0 %v319
    %v1563 = vpop.f32.mrb[0].mxu0
    %v1564 = vadd.f32 %v1521, %v1563
    %v1565 = vpop.f32.mrb[0].mxu0
    %v1566 = vadd.f32 %v1523, %v1565
    %v1567 = vpop.f32.mrb[0].mxu0
    %v1568 = vadd.f32 %v1525, %v1567
    %v1569 = vpop.f32.mrb[0].mxu0
    %v1570 = vadd.f32 %v1527, %v1569
    %1571 = vdwg.mxu0
    %1572 = vmatprep.subr.bf16.mxu0 %v1049
    %1573 = vmatpush1.bf16.msra.mxu0 %v1048
    %1574 = vmatprep.subr.bf16.mxu0 %v1053
    %1575 = vmatpush1.bf16.msra.mxu0 %v1052
    %1576 = vmatprep.subr.bf16.mxu0 %v1057
    %1577 = vmatpush1.bf16.msra.mxu0 %v1056
    %1578 = vmatprep.subr.bf16.mxu0 %v1061
    %1579 = vmatpush1.bf16.msra.mxu0 %v1060
    %1580 = vmatprep.subr.bf16.mxu0 %v1065
    %1581 = vmatpush1.bf16.msra.mxu0 %v1064
    %1582 = vmatprep.subr.bf16.mxu0 %v1069
    %1583 = vmatpush1.bf16.msra.mxu0 %v1068
    %1584 = vmatprep.subr.bf16.mxu0 %v1073
    %1585 = vmatpush1.bf16.msra.mxu0 %v1072
    %1586 = vmatprep.subr.bf16.mxu0 %v1077
    %1587 = vmatpush1.bf16.msra.mxu0 %v1076
    %1588 = vmatprep.subr.bf16.mxu0 %v1081
    %1589 = vmatpush1.bf16.msra.mxu0 %v1080
    %1590 = vmatprep.subr.bf16.mxu0 %v1085
    %1591 = vmatpush1.bf16.msra.mxu0 %v1084
    %1592 = vmatprep.subr.bf16.mxu0 %v1089
    %1593 = vmatpush1.bf16.msra.mxu0 %v1088
    %1594 = vmatprep.subr.bf16.mxu0 %v1093
    %1595 = vmatpush1.bf16.msra.mxu0 %v1092
    %1596 = vmatprep.subr.bf16.mxu0 %v1097
    %1597 = vmatpush1.bf16.msra.mxu0 %v1096
    %1598 = vmatprep.subr.bf16.mxu0 %v1101
    %1599 = vmatpush1.bf16.msra.mxu0 %v1100
    %1600 = vmatprep.subr.bf16.mxu0 %v1105
    %1601 = vmatpush1.bf16.msra.mxu0 %v1104
    %1602 = vmatprep.subr.bf16.mxu0 %v1109
    %1603 = vmatpush1.bf16.msra.mxu0 %v1108
    %1604 = vmatprep.mubr.bf16.mxu0 %v322
    %1605 = vmatmul.mubr.bf16.gmra.mrb[0].mxu0 %v321
    %v1606 = vpop.f32.mrb[0].mxu0
    %v1607 = vadd.f32 %v1564, %v1606
    %v1608 = vpop.f32.mrb[0].mxu0
    %v1609 = vadd.f32 %v1566, %v1608
    %v1610 = vpop.f32.mrb[0].mxu0
    %v1611 = vadd.f32 %v1568, %v1610
    %v1612 = vpop.f32.mrb[0].mxu0
    %v1613 = vadd.f32 %v1570, %v1612
    %1614 = vdwg.mxu0
    %1615 = vmatprep.subr.bf16.mxu0 %v1113
    %1616 = vmatpush1.bf16.msra.mxu0 %v1112
    %1617 = vmatprep.subr.bf16.mxu0 0
    %1618 = vmatpush1.bf16.msra.mxu0 0
    %1619 = vmatprep.subr.bf16.mxu0 0
    %1620 = vmatpush1.bf16.msra.mxu0 0
    %1621 = vmatprep.subr.bf16.mxu0 0
    %1622 = vmatpush1.bf16.msra.mxu0 0
    %1623 = vmatprep.subr.bf16.mxu0 0
    %1624 = vmatpush1.bf16.msra.mxu0 0
    %1625 = vmatprep.subr.bf16.mxu0 0
    %1626 = vmatpush1.bf16.msra.mxu0 0
    %1627 = vmatprep.subr.bf16.mxu0 0
    %1628 = vmatpush1.bf16.msra.mxu0 0
    %1629 = vmatprep.subr.bf16.mxu0 0
    %1630 = vmatpush1.bf16.msra.mxu0 0
    %1631 = vmatprep.subr.bf16.mxu0 0
    %1632 = vmatpush1.bf16.msra.mxu0 0
    %1633 = vmatprep.subr.bf16.mxu0 0
    %1634 = vmatpush1.bf16.msra.mxu0 0
    %1635 = vmatprep.subr.bf16.mxu0 0
    %1636 = vmatpush1.bf16.msra.mxu0 0
    %1637 = vmatprep.subr.bf16.mxu0 0
    %1638 = vmatpush1.bf16.msra.mxu0 0
    %1639 = vmatprep.subr.bf16.mxu0 0
    %1640 = vmatpush1.bf16.msra.mxu0 0
    %1641 = vmatprep.subr.bf16.mxu0 0
    %1642 = vmatpush1.bf16.msra.mxu0 0
    %1643 = vmatprep.subr.bf16.mxu0 0
    %1644 = vmatpush1.bf16.msra.mxu0 0
    %1645 = vmatprep.subr.bf16.mxu0 0
    %1646 = vmatpush1.bf16.msra.mxu0 0
    %1647 = vmatprep.mubr.bf16.mxu0 0
    %1648 = vmatmul.mubr.bf16.gmra.mrb[0].mxu0 %v1312
    %v1649 = vpop.f32.mrb[0].mxu0
    %v1650 = vadd.f32 %v1607, %v1649
    %v1651 = vpop.f32.mrb[0].mxu0
    %v1652 = vadd.f32 %v1609, %v1651
    %v1653 = vpop.f32.mrb[0].mxu0
    %v1654 = vadd.f32 %v1611, %v1653
    %v1655 = vpop.f32.mrb[0].mxu0
    %v1656 = vadd.f32 %v1613, %v1655
    %1657 = vdwg.mxu0
    %v1658 = vmax.f32 %v1478, 0.0
    %v1659 = vmax.f32 %v1480, 0.0
    %v1660 = vmax.f32 %v1650, 0.0
    %v1661 = vmax.f32 %v1652, 0.0
    %v1662 = vmax.f32 %v1482, 0.0
    %v1663 = vmax.f32 %v1484, 0.0
    %v1664 = vmax.f32 %v1654, 0.0
    %v1665 = vmax.f32 %v1656, 0.0
    %v1666 = vpack.c.bf16 %v1662, %v1658
    %v1667 = vpack.c.bf16 %v1663, %v1659
    %v1668 = vpack.c.bf16 %v1664, %v1660
    %v1669 = vpack.c.bf16 %v1665, %v1661
    %v1670 = vld [vmem:[#allocation7] sm:$0xff]
    %v1671 = vld [vmem:[#allocation7 + $0x8] sm:$0xff]
    %v1672 = vld [vmem:[#allocation7 + $0x10] sm:$0xff]
    %v1673 = vld [vmem:[#allocation7 + $0x18] sm:$0xff]
    %v1674 = vld [vmem:[#allocation7 + $0x20] sm:$0xff]
    %v1675 = vld [vmem:[#allocation7 + $0x28] sm:$0xff]
    %v1676 = vld [vmem:[#allocation7 + $0x30] sm:$0xff]
    %v1677 = vld [vmem:[#allocation7 + $0x38] sm:$0xff]
    %v1678 = vld [vmem:[#allocation7 + $0x40] sm:$0xff]
    %v1679 = vld [vmem:[#allocation7 + $0x48] sm:$0xff]
    %v1680 = vld [vmem:[#allocation7 + $0x50] sm:$0xff]
    %v1681 = vld [vmem:[#allocation7 + $0x58] sm:$0xff]
    %v1682 = vld [vmem:[#allocation7 + $0x60] sm:$0xff]
    %v1683 = vld [vmem:[#allocation7 + $0x68] sm:$0xff]
    %v1684 = vld [vmem:[#allocation7 + $0x70] sm:$0xff]
    %v1685 = vld [vmem:[#allocation7 + $0x78] sm:$0xff]
    %v1686 = vld [vmem:[#allocation7 + $0x80] sm:$0xff]
    %v1687 = vld [vmem:[#allocation7 + $0x88] sm:$0xff]
    %v1688 = vld [vmem:[#allocation7 + $0x90] sm:$0xff]
    %v1689 = vld [vmem:[#allocation7 + $0x98] sm:$0xff]
    %v1690 = vld [vmem:[#allocation7 + $0xa0] sm:$0xff]
    %v1691 = vld [vmem:[#allocation7 + $0xa8] sm:$0xff]
    %v1692 = vld [vmem:[#allocation7 + $0xb0] sm:$0xff]
    %v1693 = vld [vmem:[#allocation7 + $0xb8] sm:$0xff]
    %v1694 = vld [vmem:[#allocation7 + $0xc0] sm:$0xff]
    %v1695 = vld [vmem:[#allocation7 + $0xc8] sm:$0xff]
    %v1696 = vld [vmem:[#allocation7 + $0xd0] sm:$0xff]
    %v1697 = vld [vmem:[#allocation7 + $0xd8] sm:$0xff]
    %v1698 = vld [vmem:[#allocation7 + $0xe0] sm:$0xff]
    %v1699 = vld [vmem:[#allocation7 + $0xe8] sm:$0xff]
    %v1700 = vld [vmem:[#allocation7 + $0xf0] sm:$0xff]
    %v1701 = vld [vmem:[#allocation7 + $0xf8] sm:$0xff]
    %v1702 = vld [vmem:[#allocation7 + $0x100] sm:$0xff]
    %v1703 = vld [vmem:[#allocation7 + $0x108] sm:$0xff]
    %v1704 = vld [vmem:[#allocation7 + $0x110] sm:$0xff]
    %v1705 = vld [vmem:[#allocation7 + $0x118] sm:$0xff]
    %v1706 = vld [vmem:[#allocation7 + $0x120] sm:$0xff]
    %v1707 = vld [vmem:[#allocation7 + $0x128] sm:$0xff]
    %v1708 = vld [vmem:[#allocation7 + $0x130] sm:$0xff]
    %v1709 = vld [vmem:[#allocation7 + $0x138] sm:$0xff]
    %v1710 = vld [vmem:[#allocation7 + $0x140] sm:$0xff]
    %v1711 = vld [vmem:[#allocation7 + $0x148] sm:$0xff]
    %v1712 = vld [vmem:[#allocation7 + $0x150] sm:$0xff]
    %v1713 = vld [vmem:[#allocation7 + $0x158] sm:$0xff]
    %v1714 = vld [vmem:[#allocation7 + $0x160] sm:$0xff]
    %v1715 = vld [vmem:[#allocation7 + $0x168] sm:$0xff]
    %v1716 = vld [vmem:[#allocation7 + $0x170] sm:$0xff]
    %v1717 = vld [vmem:[#allocation7 + $0x178] sm:$0xff]
    %v1718 = vld [vmem:[#allocation7 + $0x180] sm:$0xff]
    %v1719 = vld [vmem:[#allocation7 + $0x188] sm:$0xff]
    %v1720 = vld [vmem:[#allocation7 + $0x190] sm:$0xff]
    %v1721 = vld [vmem:[#allocation7 + $0x198] sm:$0xff]
    %v1722 = vld [vmem:[#allocation7 + $0x1a0] sm:$0xff]
    %v1723 = vld [vmem:[#allocation7 + $0x1a8] sm:$0xff]
    %v1724 = vld [vmem:[#allocation7 + $0x1b0] sm:$0xff]
    %v1725 = vld [vmem:[#allocation7 + $0x1b8] sm:$0xff]
    %v1726 = vld [vmem:[#allocation7 + $0x1c0] sm:$0xff]
    %v1727 = vld [vmem:[#allocation7 + $0x1c8] sm:$0xff]
    %v1728 = vld [vmem:[#allocation7 + $0x1d0] sm:$0xff]
    %v1729 = vld [vmem:[#allocation7 + $0x1d8] sm:$0xff]
    %v1730 = vld [vmem:[#allocation7 + $0x1e0] sm:$0xff]
    %v1731 = vld [vmem:[#allocation7 + $0x1e8] sm:$0xff]
    %v1732 = vld [vmem:[#allocation7 + $0x1f0] sm:$0xff]
    %v1733 = vld [vmem:[#allocation7 + $0x1f8] sm:$0xff]
    %v1734 = vld [vmem:[%s4] sm:$0x3]
    %v1736 = vlaneseq
    %v1737 = vshrl.u32 %v1736, 7
    %v1738 = vsub.s32 0, %v1737
    %v1739 = vrot.slane %v1734, %v1738
    %v1740 = vlaneseq
    %v1741 = vshrl.u32 %v1740, 7
    %v1742 = vsub.s32 1, %v1741
    %v1743 = vrot.slane %v1734, %v1742
    %v1810 = vunpack.c.l.b16 %v1670
    %v1811 = vunpack.c.h.b16 %v1670
    %v1812 = vunpack.c.l.b16 %v1671
    %v1813 = vunpack.c.h.b16 %v1671
    %v1814 = vunpack.c.l.b16 %v1672
    %v1815 = vunpack.c.h.b16 %v1672
    %v1816 = vunpack.c.l.b16 %v1673
    %v1817 = vunpack.c.h.b16 %v1673
    %v1818 = vunpack.c.l.b16 %v1674
    %v1819 = vunpack.c.h.b16 %v1674
    %v1820 = vunpack.c.l.b16 %v1675
    %v1821 = vunpack.c.h.b16 %v1675
    %v1822 = vunpack.c.l.b16 %v1676
    %v1823 = vunpack.c.h.b16 %v1676
    %v1824 = vunpack.c.l.b16 %v1677
    %v1825 = vunpack.c.h.b16 %v1677
    %v1826 = vunpack.c.l.b16 %v1678
    %v1827 = vunpack.c.h.b16 %v1678
    %v1828 = vunpack.c.l.b16 %v1679
    %v1829 = vunpack.c.h.b16 %v1679
    %v1830 = vunpack.c.l.b16 %v1680
    %v1831 = vunpack.c.h.b16 %v1680
    %v1832 = vunpack.c.l.b16 %v1681
    %v1833 = vunpack.c.h.b16 %v1681
    %v1834 = vunpack.c.l.b16 %v1682
    %v1835 = vunpack.c.h.b16 %v1682
    %v1836 = vunpack.c.l.b16 %v1683
    %v1837 = vunpack.c.h.b16 %v1683
    %v1838 = vunpack.c.l.b16 %v1684
    %v1839 = vunpack.c.h.b16 %v1684
    %v1840 = vunpack.c.l.b16 %v1685
    %v1841 = vunpack.c.h.b16 %v1685
    %v1842 = vunpack.c.l.b16 %v1686
    %v1843 = vunpack.c.h.b16 %v1686
    %v1844 = vunpack.c.l.b16 %v1687
    %v1845 = vunpack.c.h.b16 %v1687
    %v1846 = vunpack.c.l.b16 %v1688
    %v1847 = vunpack.c.h.b16 %v1688
    %v1848 = vunpack.c.l.b16 %v1689
    %v1849 = vunpack.c.h.b16 %v1689
    %v1850 = vunpack.c.l.b16 %v1690
    %v1851 = vunpack.c.h.b16 %v1690
    %v1852 = vunpack.c.l.b16 %v1691
    %v1853 = vunpack.c.h.b16 %v1691
    %v1854 = vunpack.c.l.b16 %v1692
    %v1855 = vunpack.c.h.b16 %v1692
    %v1856 = vunpack.c.l.b16 %v1693
    %v1857 = vunpack.c.h.b16 %v1693
    %v1858 = vunpack.c.l.b16 %v1694
    %v1859 = vunpack.c.h.b16 %v1694
    %v1860 = vunpack.c.l.b16 %v1695
    %v1861 = vunpack.c.h.b16 %v1695
    %v1862 = vunpack.c.l.b16 %v1696
    %v1863 = vunpack.c.h.b16 %v1696
    %v1864 = vunpack.c.l.b16 %v1697
    %v1865 = vunpack.c.h.b16 %v1697
    %v1866 = vunpack.c.l.b16 %v1698
    %v1867 = vunpack.c.h.b16 %v1698
    %v1868 = vunpack.c.l.b16 %v1699
    %v1869 = vunpack.c.h.b16 %v1699
    %v1870 = vunpack.c.l.b16 %v1700
    %v1871 = vunpack.c.h.b16 %v1700
    %v1872 = vunpack.c.l.b16 %v1701
    %v1873 = vunpack.c.h.b16 %v1701
    %v1874 = vunpack.c.l.b16 %v1702
    %v1875 = vunpack.c.h.b16 %v1702
    %v1876 = vunpack.c.l.b16 %v1703
    %v1877 = vunpack.c.h.b16 %v1703
    %v1878 = vunpack.c.l.b16 %v1704
    %v1879 = vunpack.c.h.b16 %v1704
    %v1880 = vunpack.c.l.b16 %v1705
    %v1881 = vunpack.c.h.b16 %v1705
    %v1882 = vunpack.c.l.b16 %v1706
    %v1883 = vunpack.c.h.b16 %v1706
    %v1884 = vunpack.c.l.b16 %v1707
    %v1885 = vunpack.c.h.b16 %v1707
    %v1886 = vunpack.c.l.b16 %v1708
    %v1887 = vunpack.c.h.b16 %v1708
    %v1888 = vunpack.c.l.b16 %v1709
    %v1889 = vunpack.c.h.b16 %v1709
    %v1890 = vunpack.c.l.b16 %v1710
    %v1891 = vunpack.c.h.b16 %v1710
    %v1892 = vunpack.c.l.b16 %v1711
    %v1893 = vunpack.c.h.b16 %v1711
    %v1894 = vunpack.c.l.b16 %v1712
    %v1895 = vunpack.c.h.b16 %v1712
    %v1896 = vunpack.c.l.b16 %v1713
    %v1897 = vunpack.c.h.b16 %v1713
    %v1898 = vunpack.c.l.b16 %v1714
    %v1899 = vunpack.c.h.b16 %v1714
    %v1900 = vunpack.c.l.b16 %v1715
    %v1901 = vunpack.c.h.b16 %v1715
    %v1902 = vunpack.c.l.b16 %v1716
    %v1903 = vunpack.c.h.b16 %v1716
    %v1904 = vunpack.c.l.b16 %v1717
    %v1905 = vunpack.c.h.b16 %v1717
    %v1906 = vunpack.c.l.b16 %v1718
    %v1907 = vunpack.c.h.b16 %v1718
    %v1908 = vunpack.c.l.b16 %v1719
    %v1909 = vunpack.c.h.b16 %v1719
    %v1910 = vunpack.c.l.b16 %v1720
    %v1911 = vunpack.c.h.b16 %v1720
    %v1912 = vunpack.c.l.b16 %v1721
    %v1913 = vunpack.c.h.b16 %v1721
    %v1914 = vunpack.c.l.b16 %v1722
    %v1915 = vunpack.c.h.b16 %v1722
    %v1916 = vunpack.c.l.b16 %v1723
    %v1917 = vunpack.c.h.b16 %v1723
    %v1918 = vunpack.c.l.b16 %v1724
    %v1919 = vunpack.c.h.b16 %v1724
    %v1920 = vunpack.c.l.b16 %v1725
    %v1921 = vunpack.c.h.b16 %v1725
    %v1922 = vunpack.c.l.b16 %v1726
    %v1923 = vunpack.c.h.b16 %v1726
    %v1924 = vunpack.c.l.b16 %v1727
    %v1925 = vunpack.c.h.b16 %v1727
    %v1926 = vunpack.c.l.b16 %v1728
    %v1927 = vunpack.c.h.b16 %v1728
    %v1928 = vunpack.c.l.b16 %v1729
    %v1929 = vunpack.c.h.b16 %v1729
    %v1930 = vunpack.c.l.b16 %v1730
    %v1931 = vunpack.c.h.b16 %v1730
    %v1932 = vunpack.c.l.b16 %v1731
    %v1933 = vunpack.c.h.b16 %v1731
    %v1934 = vunpack.c.l.b16 %v1732
    %v1935 = vunpack.c.h.b16 %v1732
    %v1936 = vunpack.c.l.b16 %v1733
    %v1937 = vunpack.c.h.b16 %v1733
    %v1938 = vpack.c.b16 %v1812, %v1810
    %v1939 = vpack.c.b16 %v1813, %v1811
    %v1940 = vpack.c.b16 %v1816, %v1814
    %v1941 = vpack.c.b16 %v1817, %v1815
    %v1942 = vpack.c.b16 %v1820, %v1818
    %v1943 = vpack.c.b16 %v1821, %v1819
    %v1944 = vpack.c.b16 %v1824, %v1822
    %v1945 = vpack.c.b16 %v1825, %v1823
    %v1946 = vpack.c.b16 %v1828, %v1826
    %v1947 = vpack.c.b16 %v1829, %v1827
    %v1948 = vpack.c.b16 %v1832, %v1830
    %v1949 = vpack.c.b16 %v1833, %v1831
    %v1950 = vpack.c.b16 %v1836, %v1834
    %v1951 = vpack.c.b16 %v1837, %v1835
    %v1952 = vpack.c.b16 %v1840, %v1838
    %v1953 = vpack.c.b16 %v1841, %v1839
    %v1954 = vpack.c.b16 %v1844, %v1842
    %v1955 = vpack.c.b16 %v1845, %v1843
    %v1956 = vpack.c.b16 %v1848, %v1846
    %v1957 = vpack.c.b16 %v1849, %v1847
    %v1958 = vpack.c.b16 %v1852, %v1850
    %v1959 = vpack.c.b16 %v1853, %v1851
    %v1960 = vpack.c.b16 %v1856, %v1854
    %v1961 = vpack.c.b16 %v1857, %v1855
    %v1962 = vpack.c.b16 %v1860, %v1858
    %v1963 = vpack.c.b16 %v1861, %v1859
    %v1964 = vpack.c.b16 %v1864, %v1862
    %v1965 = vpack.c.b16 %v1865, %v1863
    %v1966 = vpack.c.b16 %v1868, %v1866
    %v1967 = vpack.c.b16 %v1869, %v1867
    %v1968 = vpack.c.b16 %v1872, %v1870
    %v1969 = vpack.c.b16 %v1873, %v1871
    %v1970 = vpack.c.b16 %v1876, %v1874
    %v1971 = vpack.c.b16 %v1877, %v1875
    %v1972 = vpack.c.b16 %v1880, %v1878
    %v1973 = vpack.c.b16 %v1881, %v1879
    %v1974 = vpack.c.b16 %v1884, %v1882
    %v1975 = vpack.c.b16 %v1885, %v1883
    %v1976 = vpack.c.b16 %v1888, %v1886
    %v1977 = vpack.c.b16 %v1889, %v1887
    %v1978 = vpack.c.b16 %v1892, %v1890
    %v1979 = vpack.c.b16 %v1893, %v1891
    %v1980 = vpack.c.b16 %v1896, %v1894
    %v1981 = vpack.c.b16 %v1897, %v1895
    %v1982 = vpack.c.b16 %v1900, %v1898
    %v1983 = vpack.c.b16 %v1901, %v1899
    %v1984 = vpack.c.b16 %v1904, %v1902
    %v1985 = vpack.c.b16 %v1905, %v1903
    %v1986 = vpack.c.b16 %v1908, %v1906
    %v1987 = vpack.c.b16 %v1909, %v1907
    %v1988 = vpack.c.b16 %v1912, %v1910
    %v1989 = vpack.c.b16 %v1913, %v1911
    %v1990 = vpack.c.b16 %v1916, %v1914
    %v1991 = vpack.c.b16 %v1917, %v1915
    %v1992 = vpack.c.b16 %v1920, %v1918
    %v1993 = vpack.c.b16 %v1921, %v1919
    %v1994 = vpack.c.b16 %v1924, %v1922
    %v1995 = vpack.c.b16 %v1925, %v1923
    %v1996 = vpack.c.b16 %v1928, %v1926
    %v1997 = vpack.c.b16 %v1929, %v1927
    %v1998 = vpack.c.b16 %v1932, %v1930
    %v1999 = vpack.c.b16 %v1933, %v1931
    %v2000 = vpack.c.b16 %v1936, %v1934
    %v2001 = vpack.c.b16 %v1937, %v1935
    %2066 = vmatprep.subr.bf16.mxu0 %v1939
    %2067 = vmatpush1.bf16.msra.mxu0 %v1938
    %2068 = vmatprep.subr.bf16.mxu0 %v1941
    %2069 = vmatpush1.bf16.msra.mxu0 %v1940
    %2070 = vmatprep.subr.bf16.mxu0 %v1943
    %2071 = vmatpush1.bf16.msra.mxu0 %v1942
    %2072 = vmatprep.subr.bf16.mxu0 %v1945
    %2073 = vmatpush1.bf16.msra.mxu0 %v1944
    %2074 = vmatprep.subr.bf16.mxu0 %v1947
    %2075 = vmatpush1.bf16.msra.mxu0 %v1946
    %2076 = vmatprep.subr.bf16.mxu0 %v1949
    %2077 = vmatpush1.bf16.msra.mxu0 %v1948
    %2078 = vmatprep.subr.bf16.mxu0 %v1951
    %2079 = vmatpush1.bf16.msra.mxu0 %v1950
    %2080 = vmatprep.subr.bf16.mxu0 %v1953
    %2081 = vmatpush1.bf16.msra.mxu0 %v1952
    %2082 = vmatprep.subr.bf16.mxu0 %v1955
    %2083 = vmatpush1.bf16.msra.mxu0 %v1954
    %2084 = vmatprep.subr.bf16.mxu0 %v1957
    %2085 = vmatpush1.bf16.msra.mxu0 %v1956
    %2086 = vmatprep.subr.bf16.mxu0 %v1959
    %2087 = vmatpush1.bf16.msra.mxu0 %v1958
    %2088 = vmatprep.subr.bf16.mxu0 %v1961
    %2089 = vmatpush1.bf16.msra.mxu0 %v1960
    %2090 = vmatprep.subr.bf16.mxu0 %v1963
    %2091 = vmatpush1.bf16.msra.mxu0 %v1962
    %2092 = vmatprep.subr.bf16.mxu0 %v1965
    %2093 = vmatpush1.bf16.msra.mxu0 %v1964
    %2094 = vmatprep.subr.bf16.mxu0 %v1967
    %2095 = vmatpush1.bf16.msra.mxu0 %v1966
    %2096 = vmatprep.subr.bf16.mxu0 %v1969
    %2097 = vmatpush1.bf16.msra.mxu0 %v1968
    %2098 = vmatprep.mubr.bf16.mxu0 %v1667
    %2099 = vmatmul.mubr.bf16.gmra.mrb[0].mxu0 %v1666
    %v2100 = vpop.f32.mrb[0].mxu0
    %v2101 = vadd.f32 %v1739, %v2100
    %v2102 = vpop.f32.mrb[0].mxu0
    %v2103 = vadd.f32 %v1743, %v2102
    %v2104 = vpop.f32.mrb[0].mxu0
    %v2105 = vadd.f32 %v1739, %v2104
    %v2106 = vpop.f32.mrb[0].mxu0
    %v2107 = vadd.f32 %v1743, %v2106
    %2108 = vdwg.mxu0
    %2109 = vmatprep.subr.bf16.mxu0 %v1971
    %2110 = vmatpush1.bf16.msra.mxu0 %v1970
    %2111 = vmatprep.subr.bf16.mxu0 %v1973
    %2112 = vmatpush1.bf16.msra.mxu0 %v1972
    %2113 = vmatprep.subr.bf16.mxu0 %v1975
    %2114 = vmatpush1.bf16.msra.mxu0 %v1974
    %2115 = vmatprep.subr.bf16.mxu0 %v1977
    %2116 = vmatpush1.bf16.msra.mxu0 %v1976
    %2117 = vmatprep.subr.bf16.mxu0 %v1979
    %2118 = vmatpush1.bf16.msra.mxu0 %v1978
    %2119 = vmatprep.subr.bf16.mxu0 %v1981
    %2120 = vmatpush1.bf16.msra.mxu0 %v1980
    %2121 = vmatprep.subr.bf16.mxu0 %v1983
    %2122 = vmatpush1.bf16.msra.mxu0 %v1982
    %2123 = vmatprep.subr.bf16.mxu0 %v1985
    %2124 = vmatpush1.bf16.msra.mxu0 %v1984
    %2125 = vmatprep.subr.bf16.mxu0 %v1987
    %2126 = vmatpush1.bf16.msra.mxu0 %v1986
    %2127 = vmatprep.subr.bf16.mxu0 %v1989
    %2128 = vmatpush1.bf16.msra.mxu0 %v1988
    %2129 = vmatprep.subr.bf16.mxu0 %v1991
    %2130 = vmatpush1.bf16.msra.mxu0 %v1990
    %2131 = vmatprep.subr.bf16.mxu0 %v1993
    %2132 = vmatpush1.bf16.msra.mxu0 %v1992
    %2133 = vmatprep.subr.bf16.mxu0 %v1995
    %2134 = vmatpush1.bf16.msra.mxu0 %v1994
    %2135 = vmatprep.subr.bf16.mxu0 %v1997
    %2136 = vmatpush1.bf16.msra.mxu0 %v1996
    %2137 = vmatprep.subr.bf16.mxu0 %v1999
    %2138 = vmatpush1.bf16.msra.mxu0 %v1998
    %2139 = vmatprep.subr.bf16.mxu0 %v2001
    %2140 = vmatpush1.bf16.msra.mxu0 %v2000
    %2141 = vmatprep.mubr.bf16.mxu0 %v1669
    %2142 = vmatmul.mubr.bf16.gmra.mrb[0].mxu0 %v1668
    %v2143 = vpop.f32.mrb[0].mxu0
    %v2144 = vadd.f32 %v2101, %v2143
    %v2145 = vpop.f32.mrb[0].mxu0
    %v2146 = vadd.f32 %v2103, %v2145
    %v2147 = vpop.f32.mrb[0].mxu0
    %v2148 = vadd.f32 %v2105, %v2147
    %v2149 = vpop.f32.mrb[0].mxu0
    %v2150 = vadd.f32 %v2107, %v2149
    %2151 = vdwg.mxu0
    %v2152 = vmax.f32 %v2144, 0.0
    %v2153 = vmax.f32 %v2146, 0.0
    %v2154 = vmax.f32 %v2148, 0.0
    %v2155 = vmax.f32 %v2150, 0.0
    %v2156 = vld [vmem:[%s5] sm:$0x3]
    %v2157 = vunpack.c.l.bf16 %v2156
    %v2159 = vlaneseq
    %v2160 = vshrl.u32 %v2159, 7
    %v2161 = vsub.s32 0, %v2160
    %v2162 = vrot.slane %v2157, %v2161
    %v2163 = vlaneseq
    %v2164 = vshrl.u32 %v2163, 7
    %v2165 = vsub.s32 2, %v2164
    %v2166 = vrot.slane %v2157, %v2165
    %v2169 = vlaneseq
    %v2170 = vshrl.u32 %v2169, 7
    %v2171 = vsub.s32 0, %v2170
    %v2172 = vrot.slane %v2162, %v2171
    %v2173 = vlaneseq
    %v2174 = vshrl.u32 %v2173, 7
    %v2175 = vsub.s32 0, %v2174
    %v2176 = vrot.slane %v2166, %v2175
    %v2177 = vmul.f32 %v2152, %v2172
    %v2178 = vmul.f32 %v2153, %v2176
    %v2179 = vmul.f32 %v2154, %v2172
    %v2180 = vmul.f32 %v2155, %v2176
    %v2181 = vadd.f32 %v2177, %v2178
    %2182 = vadd.xlane.f32.xlu0 %v2181
    %v2183 = vpop.xlane.xlu0 %2182
    %v2184 = vadd.f32 %v2179, %v2180
    %2185 = vadd.xlane.f32.xlu0 %v2184
    %v2186 = vpop.xlane.xlu0 %2185
    %s2187 = sld [smem:[#allocation2]]
    %v2188 = vstv %s2187
    %v2189 = vadd.f32 %v2183, %v2188
    %v2190 = vadd.f32 %v2186, %v2188
    %v2191 = vxor.u32 %v2189, 2147483648
    %v2192 = vxor.u32 %v2190, 2147483648
    %v2193 = vmul.f32 %v2191, 1.442695
    %v2194 = vpow.pop %v2193
    %v2195 = vmul.f32 %v2192, 1.442695
    %v2196 = vpow.pop %v2195
    %v2197 = vadd.f32 %v2194, 1.0
    %v2198 = vadd.f32 %v2196, 1.0
    %v2199 = vrcp.pop %v2197
    %v2200 = vmul.f32 1.0, %v2199
    %v2201 = vrcp.pop %v2198
    %v2202 = vmul.f32 1.0, %v2201
    %vm2203 = vcmask 7168
    %2204 = vst.msk [vmem:[%s7] sm:$0xff] %vm2203, %v2200
    %2205 = vst.msk [vmem:[%s7 + $0x8] sm:$0xff] %vm2203, %v2202
    // Predicated region
    $region42: #{tpu_custom_call.1} parent=1 // pred_check
      _
    $region43: #{tpu_custom_call.1} parent=1 // pred_check_branch
      %2207 = sbr.rel (0) target = $region45
    $region44: #{tpu_custom_call.1} parent=1 // pred_region
      _
    $region45: #{tpu_custom_call.1} parent=1 // pred_fallthru
      _
    // Predicated region
    $region46: #{tpu_custom_call.1} parent=1 // pred_check
      _
    $region47: #{tpu_custom_call.1} parent=1 // pred_check_branch
      %2209 = sbr.rel (0) target = $region49
    $region48: #{tpu_custom_call.1} parent=1 // pred_region
      _
    $region49: #{tpu_custom_call.1} parent=1 // pred_fallthru
      _
    %2210 = vsyncpa [#allocation4], 1
    %2211 = vsyncpa [#allocation6], 1

</llo_original>
